<compile_context>
chip_gen: v7x
topology: tpu7x:2x2x1
jax: 0.10.0
libtpu: 0.0.40
codegen_flags: <defaults>
</compile_context>

<pallas_src>
import functools
import math

import jax
import jax.numpy as jnp
import numpy as np
from jax.experimental import pallas as pl
from jax.experimental.pallas import tpu as pltpu


_EPS = 1e-4
_LOG_EPS = math.log(_EPS)            # log(1e-4)
_LOG_1M_EPS = math.log(1.0 - _EPS)   # log(1 - 1e-4)


# ----------------------------- focal per-tile --------------------------------

def _focal_partial(x, gt, valid):
    """Combined focal loss sum and positive count for one tile -> ((1,1),(1,1)).

    pred = clamp(sigmoid(x), 1e-4, 1-1e-4); log terms via the softplus identity
    (one exp + one log) and clamped, which equals log of the clamped prob.
    pos/neg merged: (1-gt)^4 == 0 exactly at gt==1, so no explicit neg mask.
    """
    x = x.astype(jnp.float32)
    gt = gt.astype(jnp.float32)
    z = jnp.exp(-jnp.abs(x))                                  # EUP
    log1pz = jnp.log(1.0 + z)                                 # EUP
    log_p = jnp.clip(jnp.minimum(x, 0.0) - log1pz, _LOG_EPS, _LOG_1M_EPS)
    log_1mp = jnp.clip(-jnp.maximum(x, 0.0) - log1pz, _LOG_EPS, _LOG_1M_EPS)
    # sigmoid(x): approx reciprocal runs on the EUP slot (VALU is the
    # bottleneck on v6e/v7x); ~2e-4 rel error, within tolerance.
    pred = jnp.where(x >= 0.0, 1.0, z) * pl.reciprocal(1.0 + z, approx=True)
    pred = jnp.clip(pred, _EPS, 1.0 - _EPS)

    pos = (gt == 1.0).astype(jnp.float32)
    one_m_pred = 1.0 - pred
    t = (1.0 - gt) * (1.0 - gt)
    neg_w = t * t                                             # (1-gt)^4
    loss_e = (log_p * one_m_pred * one_m_pred * pos
              + log_1mp * pred * pred * neg_w)
    if valid is not None:
        # jnp.where (select), not multiply: safely drops any garbage (NaN/Inf)
        # read from the out-of-bounds part of a ragged last tile.
        loss_e = jnp.where(valid, loss_e, 0.0)
        pos = jnp.where(valid, pos, 0.0)
    return jnp.sum(loss_e, keepdims=True), jnp.sum(pos, keepdims=True)


# ------------------------------- fused kernel --------------------------------

def _ae_loss_kernel(tl_ref, gt_tl_ref, br_ref, gt_br_ref, ct_ref, gt_ct_ref,
                    tag0_ref, tag1_ref, mask_ref, tag0_t_ref, tag1_t_ref,
                    mask_t_ref, regr_ref, gt_regr_ref, mask_bm_ref,
                    out_ref, *, tile_rows, nr_inner, nr_total, num_rows,
                    needs_mask, skip_needed):
    p = pl.program_id(0)            # parallel chunk (megacore split)
    r = pl.program_id(1)            # row-tile reduction axis (arbitrary, last)
    gidx = p * nr_inner + r         # global tile index

    @pl.when(r == 0)
    def _init():
        out_ref[...] = jnp.zeros_like(out_ref)

    def focal_vals(mask_tail):
        if mask_tail:               # only traced for the ragged-last-tile path
            cols = tl_ref.shape[-1]
            base = gidx * tile_rows
            local = jax.lax.broadcasted_iota(jnp.int32, (tile_rows, cols), 0)
            valid = (local + base) < num_rows
        else:
            valid = None
        row = jax.lax.broadcasted_iota(jnp.int32, (16, 128), 0)
        vals = jnp.zeros((16, 128), jnp.float32)
        pairs = ((tl_ref, gt_tl_ref), (br_ref, gt_br_ref), (ct_ref, gt_ct_ref))
        for i, (x_ref, g_ref) in enumerate(pairs):
            s, npos = _focal_partial(x_ref[...], g_ref[...], valid)
            vals = (vals
                    + jnp.where(row == 2 * i, s, 0.0)
                    + jnp.where(row == 2 * i + 1, npos, 0.0))
        return vals.reshape(out_ref.shape)

    if needs_mask:
        # mask math only on the last (ragged) tile; also skips the duplicate
        # clamped tile when the chunks are uneven (gidx > nr_total - 1).
        @pl.when(gidx < nr_total - 1)
        def _():
            out_ref[...] += focal_vals(False)

        @pl.when(gidx == nr_total - 1)
        def _():
            out_ref[...] += focal_vals(True)
    elif skip_needed:
        @pl.when(gidx < nr_total)
        def _():
            out_ref[...] += focal_vals(False)
    else:
        out_ref[...] += focal_vals(False)

    # ---- tiny AE pull/push + smooth-L1 tail, fused into the final step of
    #      parallel chunk 0 (no second pallas_call launch overhead) ----
    @pl.when(jnp.logical_and(p == 0, r == nr_inner - 1))
    def _tail():
        tag0 = tag0_ref[...]             # (B, M)
        tag1 = tag1_ref[...]
        m = mask_ref[...]                # (B, M) float {0,1}
        bsz = m.shape[0]

        num = jnp.sum(m, axis=1, keepdims=True)          # (B, 1)
        inv_num = 1.0 / (num + 1e-4)
        tmean = (tag0 + tag1) * 0.5
        d0 = tag0 - tmean
        d1 = tag1 - tmean
        pull = jnp.sum((d0 * d0 + d1 * d1) * m * inv_num, keepdims=True)

        # push: per-batch (M, M) pairwise term; pre-transposed copies avoid
        # any in-kernel lane<->sublane relayout.  B is small & static.
        tag0_t = tag0_t_ref[...]         # (M, B)
        tag1_t = tag1_t_ref[...]
        m_t = mask_t_ref[...]
        tmean_t = (tag0_t + tag1_t) * 0.5
        push = jnp.zeros((1, 1), jnp.float32)
        # TODO(synk): switch to a batched / roll-based formulation if B grows.
        for b in range(bsz):
            tm_row = tmean[b:b + 1, :]
            tm_col = tmean_t[:, b:b + 1]
            mb_row = m[b:b + 1, :]
            mb_col = m_t[:, b:b + 1]
            num_b = num[b:b + 1, :]
            inv_b = inv_num[b:b + 1, :]
            dist = jnp.maximum(1.0 - jnp.abs(tm_row - tm_col), 0.0) - inv_b
            dist = dist / ((num_b - 1.0) * num_b + 1e-4)
            push = push + jnp.sum(dist * (mb_row * mb_col), keepdims=True)

        # regression smooth-L1 on lane-dense (6, B*M) slabs
        pred = regr_ref[...]
        gtr = gt_regr_ref[...]
        mbm = mask_bm_ref[...]           # (1, B*M)
        ad = jnp.abs(pred - gtr)
        l1 = jnp.where(ad < 1.0, 0.5 * ad * ad, ad - 0.5)
        regr_sum = jnp.sum(l1 * mbm, keepdims=True)
        num_reg = jnp.sum(mbm, keepdims=True)

        row = jax.lax.broadcasted_iota(jnp.int32, (16, 128), 0)
        tail_vals = (jnp.where(row == 8, pull, 0.0)
                     + jnp.where(row == 9, push, 0.0)
                     + jnp.where(row == 10, regr_sum, 0.0)
                     + jnp.where(row == 11, num_reg, 0.0))
        out_ref[...] += tail_vals.reshape(out_ref.shape)


# ------------------------------- tile planning -------------------------------

def _plan_focal_tiling(BC, HW, dtypes):
    """Pick (rows, cols, tile_rows, needs_mask): no HBM padding, VMEM-bounded."""
    itemsizes = [dt.itemsize for dt in dtypes]
    min_isz, max_isz = min(itemsizes), max(itemsizes)
    mult = 8 if min_isz >= 4 else (16 if min_isz == 2 else 32)
    N = BC * HW
    if N % 128 == 0:
        rows, cols = N // 128, 128           # free reshape, lane-dense blocks
    else:
        rows, cols = BC, HW
        # TODO(synk): add a lane-tiling grid axis for the rare case where
        # BC*HW is not a multiple of 128 AND a `mult`-row x HW tile exceeds
        # the VMEM budget.
    budget_per_tile = 2 << 20                # bytes per input per buffer
    cap = max(mult, (budget_per_tile // (cols * max_isz)) // mult * mult)
    if rows < 2 * mult:
        return rows, cols, rows, False       # single full-extent tile
    upper = max(mult, min(cap, (rows // 2) // mult * mult))
    min_accept = max(mult, (upper // 4) // mult * mult)
    for prefer_even in (True, False):        # even tile count -> clean 2-way split
        for cand in range(upper, min_accept - 1, -mult):
            if rows % cand == 0 and (not prefer_even or (rows // cand) % 2 == 0):
                return rows, cols, cand, False
    # no acceptable divisor: ragged last tile, masked in-kernel (no HBM pad)
    return rows, cols, upper, True


# --------------------------------- wrapper ------------------------------------

def ae_loss_forward(outs, targets, pull_weight=1.0, push_weight=1.0,
                    regr_weight=1.0):
    tl_heat = outs['tl_heat']
    B, C, H, W = tl_heat.shape
    M = outs['tl_tag'].shape[1]
    BC, HW = B * C, H * W

    heats = [outs['tl_heat'], targets['tl_heatmaps'],
             outs['br_heat'], targets['br_heatmaps'],
             outs['ct_heat'], targets['ct_heatmaps']]
    rows, cols, tile_rows, needs_mask = _plan_focal_tiling(
        BC, HW, [h.dtype for h in heats])
    # Pure reshapes in native dtype: no pad / astype HBM round trips; the
    # kernel upcasts per-tile.
    heats = [h.reshape(rows, cols) for h in heats]

    nr_total = pl.cdiv(rows, tile_rows)
    if nr_total >= 2:
        num_par = 2                          # always feed both v7x TensorCores
        nr_inner = pl.cdiv(nr_total, 2)
    else:
        num_par, nr_inner = 1, nr_total
    skip_needed = (num_par * nr_inner != nr_total)

    if skip_needed:
        def heat_idx(p, r, _ni=nr_inner, _last=nr_total - 1):
            return (jnp.minimum(p * _ni + r, _last), 0)
    else:
        def heat_idx(p, r, _ni=nr_inner):
            return (p * _ni + r, 0)
    # NOTE: if an xprof/bundle check on v5e shows exposed DMA, add
    # pipeline_mode=pl.Buffered(3) here (VMEM budget permits it).
    heat_spec = pl.BlockSpec((tile_rows, cols), heat_idx)

    # ---- tiny AE / regression tail inputs (full-block, fetched once) ----
    maskf = targets['tag_masks'].astype(jnp.float32)            # (B, M)
    tag0 = outs['tl_tag'].reshape(B, M).astype(jnp.float32)
    tag1 = outs['br_tag'].reshape(B, M).astype(jnp.float32)

    def flat_regr(x):                                           # -> (2, B*M)
        return x.reshape(B * M, 2).astype(jnp.float32).T

    pred_regr = jnp.concatenate(
        [flat_regr(outs['tl_regr']), flat_regr(outs['br_regr']),
         flat_regr(outs['ct_regr'])], axis=0)                   # (6, B*M)
    gt_regr = jnp.concatenate(
        [flat_regr(targets['tl_regrs']), flat_regr(targets['br_regrs']),
         flat_regr(targets['ct_regrs'])], axis=0)
    mask_bm = maskf.reshape(1, B * M)
    tails = [tag0, tag1, maskf, tag0.T, tag1.T, maskf.T,
             pred_regr, gt_regr, mask_bm]

    def const_spec(a):
        nd = a.ndim
        return pl.BlockSpec(a.shape, lambda p, r, _nd=nd: (0,) * _nd)

    n_elem = 3 * BC * HW
    heat_bytes = sum(int(np.prod(h.shape)) * h.dtype.itemsize for h in heats)
    vmem_need = sum(2 * tile_rows * cols * h.dtype.itemsize for h in heats)
    vmem_limit = int(min(max(vmem_need + (8 << 20), 16 << 20), 48 << 20))

    out = pl.pallas_call(
        functools.partial(_ae_loss_kernel, tile_rows=tile_rows,
                          nr_inner=nr_inner, nr_total=nr_total,
                          num_rows=rows, needs_mask=needs_mask,
                          skip_needed=skip_needed),
        out_shape=jax.ShapeDtypeStruct((num_par, 16, 128), jnp.float32),
        grid=(num_par, nr_inner),
        in_specs=[heat_spec] * 6 + [const_spec(a) for a in tails],
        out_specs=pl.BlockSpec((1, 16, 128), lambda p, r: (p, 0, 0)),
        compiler_params=pltpu.CompilerParams(
            dimension_semantics=("parallel", "arbitrary"),
            vmem_limit_bytes=vmem_limit),
        cost_estimate=pl.CostEstimate(
            flops=int(24 * n_elem),
            transcendentals=int(2 * n_elem),
            bytes_accessed=int(heat_bytes)),
    )(*heats, *tails)

    acc = jnp.sum(out[:, :, 0], axis=0)       # (16,), summed over the 2 chunks
    focal = jnp.float32(0.0)
    for i in range(3):
        s, npos = acc[2 * i], acc[2 * i + 1]
        # merged pos+neg sum: the pos part is 0 whenever npos == 0, so the
        # reference's "if pos_pred.nelement()==0" branch collapses to
        # dividing by max(npos, 1).
        focal = focal - s / jnp.maximum(npos, 1.0)

    pull = pull_weight * acc[8]
    push = push_weight * acc[9]
    regr = regr_weight * acc[10] / (acc[11] + 1e-4)

    nstacks = 1.0  # len(tl_heats) == 1 in this module's forward
    return (jnp.reshape(focal / nstacks, (1,)),
            jnp.reshape(pull / nstacks, (1,)),
            jnp.reshape(push / nstacks, (1,)),
            jnp.reshape(regr / nstacks, (1,)))


# -------------------------- pure-JAX reference -------------------------------

def _ref_forward(outs, targets):
    def sig(x):
        return jnp.clip(jax.nn.sigmoid(x), 1e-4, 1 - 1e-4)

    def neg_loss(pred, gt):
        posf = (gt == 1.0).astype(jnp.float32)
        negf = (gt < 1.0).astype(jnp.float32)
        neg_w = (1.0 - gt) ** 4
        pos_loss = jnp.sum(jnp.log(pred) * (1 - pred) ** 2 * posf)
        neg_loss_ = jnp.sum(jnp.log(1 - pred) * pred ** 2 * neg_w * negf)
        num_pos = jnp.sum(posf)
        return jnp.where(num_pos == 0, -neg_loss_, -(pos_loss + neg_loss_) / num_pos)

    def ae_loss(tag0, tag1, mask):
        mf = mask.astype(jnp.float32)
        num = jnp.sum(mf, axis=1, keepdims=True)
        t0, t1 = tag0[..., 0], tag1[..., 0]
        tm = (t0 + t1) / 2
        pull = (jnp.sum(jnp.square(t0 - tm) / (num + 1e-4) * mf) +
                jnp.sum(jnp.square(t1 - tm) / (num + 1e-4) * mf))
        mask2 = mf[:, None, :] * mf[:, :, None]
        num3 = num[:, :, None]
        num2 = (num3 - 1) * num3
        dist = tm[:, None, :] - tm[:, :, None]
        dist = jnp.maximum(1 - jnp.abs(dist), 0.0)
        dist = dist - 1.0 / (num3 + 1e-4)
        dist = dist / (num2 + 1e-4)
        push = jnp.sum(dist * mask2)
        return pull, push

    def regr_loss(regr, gt, mask):
        num = jnp.sum(mask.astype(jnp.float32))
        m = mask.astype(jnp.float32)[..., None]
        ad = jnp.abs(regr - gt)
        l = jnp.where(ad < 1, 0.5 * ad * ad, ad - 0.5)
        return jnp.sum(l * m) / (num + 1e-4)

    focal = (neg_loss(sig(outs['tl_heat']), targets['tl_heatmaps']) +
             neg_loss(sig(outs['br_heat']), targets['br_heatmaps']) +
             neg_loss(sig(outs['ct_heat']), targets['ct_heatmaps']))
    pull, push = ae_loss(outs['tl_tag'], outs['br_tag'], targets['tag_masks'])
    regr = (regr_loss(outs['tl_regr'], targets['tl_regrs'], targets['tag_masks']) +
            regr_loss(outs['br_regr'], targets['br_regrs'], targets['tag_masks']) +
            regr_loss(outs['ct_regr'], targets['ct_regrs'], targets['tag_masks']))
    return focal, pull, push, regr


# --------------------------------- main --------------------------------------

if __name__ == "__main__":
    B, C, H, W, M = 2, 4, 16, 16, 8
    key = jax.random.PRNGKey(0)
    ks = jax.random.split(key, 16)

    tl_heat = jax.random.normal(ks[0], (B, C, H, W), jnp.float32)
    br_heat = jax.random.normal(ks[1], (B, C, H, W), jnp.float32)
    ct_heat = jax.random.normal(ks[2], (B, C, H, W), jnp.float32)

    gt_tl = jax.random.uniform(ks[3], (B, C, H, W), jnp.float32, 0.0, 0.98)
    gt_br = jax.random.uniform(ks[4], (B, C, H, W), jnp.float32, 0.0, 0.98)
    gt_ct = jax.random.uniform(ks[5], (B, C, H, W), jnp.float32, 0.0, 0.98)
    gt_tl = gt_tl.at[:, :, 3, 5].set(1.0)   # exact positives
    gt_br = gt_br.at[:, :, 7, 9].set(1.0)
    gt_ct = gt_ct.at[:, :, 11, 2].set(1.0)

    tl_tag = 0.5 * jax.random.normal(ks[6], (B, M, 1), jnp.float32)
    br_tag = 0.5 * jax.random.normal(ks[7], (B, M, 1), jnp.float32)

    tl_regr = 0.4 * jax.random.normal(ks[8], (B, M, 2), jnp.float32)
    br_regr = 0.4 * jax.random.normal(ks[9], (B, M, 2), jnp.float32)
    ct_regr = 0.4 * jax.random.normal(ks[10], (B, M, 2), jnp.float32)
    gt_tl_regr = jax.random.uniform(ks[11], (B, M, 2), jnp.float32)
    gt_br_regr = jax.random.uniform(ks[12], (B, M, 2), jnp.float32)
    gt_ct_regr = jax.random.uniform(ks[13], (B, M, 2), jnp.float32)

    counts = jnp.array([5, 3])
    tag_masks = jnp.arange(M)[None, :] < counts[:, None]   # (B, M) bool

    outs = dict(tl_heat=tl_heat, br_heat=br_heat, ct_heat=ct_heat,
                tl_tag=tl_tag, br_tag=br_tag,
                tl_regr=tl_regr, br_regr=br_regr, ct_regr=ct_regr)
    targets = dict(tl_heatmaps=gt_tl, br_heatmaps=gt_br, ct_heatmaps=gt_ct,
                   tag_masks=tag_masks,
                   tl_regrs=gt_tl_regr, br_regrs=gt_br_regr, ct_regrs=gt_ct_regr)

    focal, pull, push, regr = jax.block_until_ready(ae_loss_forward(outs, targets))

    ref_focal, ref_pull, ref_push, ref_regr = _ref_forward(outs, targets)
    np.testing.assert_allclose(np.asarray(focal)[0], float(ref_focal),
                               rtol=2e-3, atol=2e-3)
    np.testing.assert_allclose(np.asarray(pull)[0], float(ref_pull),
                               rtol=2e-3, atol=2e-3)
    np.testing.assert_allclose(np.asarray(push)[0], float(ref_push),
                               rtol=2e-3, atol=2e-3)
    np.testing.assert_allclose(np.asarray(regr)[0], float(ref_regr),
                               rtol=2e-3, atol=2e-3)

    print("KERNEL_OK")
</pallas_src>

<mosaic_0001>
module attributes {stable_mosaic.version = 11 : i64} {
  func.func @_ae_loss_kernel(%arg0: i32, %arg1: i32, %arg2: memref<8x128xf32, #tpu.memory_space<vmem>>, %arg3: memref<8x128xf32, #tpu.memory_space<vmem>>, %arg4: memref<8x128xf32, #tpu.memory_space<vmem>>, %arg5: memref<8x128xf32, #tpu.memory_space<vmem>>, %arg6: memref<8x128xf32, #tpu.memory_space<vmem>>, %arg7: memref<8x128xf32, #tpu.memory_space<vmem>>, %arg8: memref<2x8xf32, #tpu.memory_space<vmem>>, %arg9: memref<2x8xf32, #tpu.memory_space<vmem>>, %arg10: memref<2x8xf32, #tpu.memory_space<vmem>>, %arg11: memref<8x2xf32, #tpu.memory_space<vmem>>, %arg12: memref<8x2xf32, #tpu.memory_space<vmem>>, %arg13: memref<8x2xf32, #tpu.memory_space<vmem>>, %arg14: memref<6x16xf32, #tpu.memory_space<vmem>>, %arg15: memref<6x16xf32, #tpu.memory_space<vmem>>, %arg16: memref<1x16xf32, #tpu.memory_space<vmem>>, %arg17: memref<1x16x128xf32, #tpu.memory_space<vmem>>) attributes {dimension_semantics = [#tpu.dimension_semantics<parallel>, #tpu.dimension_semantics<arbitrary>], iteration_bounds = array<i64: 2, 1>, scalar_prefetch = 0 : i64, scratch_operands = 0 : i64, tpu.core_type = #tpu.core_type<tc>, window_params = [{transform_indices = @transform_0, window_bounds = array<i64: 8, 128>}, {transform_indices = @transform_1, window_bounds = array<i64: 8, 128>}, {transform_indices = @transform_2, window_bounds = array<i64: 8, 128>}, {transform_indices = @transform_3, window_bounds = array<i64: 8, 128>}, {transform_indices = @transform_4, window_bounds = array<i64: 8, 128>}, {transform_indices = @transform_5, window_bounds = array<i64: 8, 128>}, {pipeline_mode = #tpu.pipeline_mode<synchronous>, transform_indices = @transform_6, window_bounds = array<i64: 2, 8>}, {pipeline_mode = #tpu.pipeline_mode<synchronous>, transform_indices = @transform_7, window_bounds = array<i64: 2, 8>}, {pipeline_mode = #tpu.pipeline_mode<synchronous>, transform_indices = @transform_8, window_bounds = array<i64: 2, 8>}, {pipeline_mode = #tpu.pipeline_mode<synchronous>, transform_indices = @transform_9, window_bounds = array<i64: 8, 2>}, {pipeline_mode = #tpu.pipeline_mode<synchronous>, transform_indices = @transform_10, window_bounds = array<i64: 8, 2>}, {pipeline_mode = #tpu.pipeline_mode<synchronous>, transform_indices = @transform_11, window_bounds = array<i64: 8, 2>}, {pipeline_mode = #tpu.pipeline_mode<synchronous>, transform_indices = @transform_12, window_bounds = array<i64: 6, 16>}, {pipeline_mode = #tpu.pipeline_mode<synchronous>, transform_indices = @transform_13, window_bounds = array<i64: 6, 16>}, {pipeline_mode = #tpu.pipeline_mode<synchronous>, transform_indices = @transform_14, window_bounds = array<i64: 1, 16>}, {transform_indices = @transform_15, window_bounds = array<i64: 1, 16, 128>}]} {
    %c0_i32 = arith.constant 0 : i32
    %0 = arith.cmpi eq, %arg1, %c0_i32 : i32
    %1 = arith.extui %0 : i1 to i32
    %c0_i32_0 = arith.constant 0 : i32
    %2 = arith.cmpi ne, %1, %c0_i32_0 : i32
    scf.if %2 {
      %cst_88 = arith.constant 0.000000e+00 : f32
      %254 = vector.broadcast %cst_88 : f32 to vector<1x16x128xf32>
      %c0_89 = arith.constant 0 : index
      %c0_90 = arith.constant 0 : index
      %c0_91 = arith.constant 0 : index
      %255 = vector.load %arg17[%c0_89, %c0_90, %c0_91] : memref<1x16x128xf32, #tpu.memory_space<vmem>>, vector<1x16x128xf32>
      tpu.vector_store %arg17[%c0_89, %c0_90, %c0_91], %254 {strides = array<i32>} : memref<1x16x128xf32, #tpu.memory_space<vmem>>, vector<1x16x128xf32>,
    } else {
    }
    %c0 = arith.constant 0 : index
    %c0_1 = arith.constant 0 : index
    %c0_2 = arith.constant 0 : index
    %3 = vector.load %arg17[%c0, %c0_1, %c0_2] : memref<1x16x128xf32, #tpu.memory_space<vmem>>, vector<1x16x128xf32>
    %4 = tpu.iota {dimensions = array<i32: 0>} : vector<16x128xi32>
    %cst = arith.constant 0.000000e+00 : f32
    %5 = vector.broadcast %cst : f32 to vector<16x128xf32>
    %c0_3 = arith.constant 0 : index
    %c0_4 = arith.constant 0 : index
    %6 = vector.load %arg2[%c0_3, %c0_4] : memref<8x128xf32, #tpu.memory_space<vmem>>, vector<8x128xf32>
    %c0_5 = arith.constant 0 : index
    %c0_6 = arith.constant 0 : index
    %7 = vector.load %arg3[%c0_5, %c0_6] : memref<8x128xf32, #tpu.memory_space<vmem>>, vector<8x128xf32>
    %8 = math.absf %6 : vector<8x128xf32>
    %cst_7 = arith.constant 0.000000e+00 : f32
    %9 = vector.broadcast %cst_7 : f32 to vector<8x128xf32>
    %10 = arith.subf %9, %8 : vector<8x128xf32>
    %11 = math.exp %10 : vector<8x128xf32>
    %cst_8 = arith.constant 1.000000e+00 : f32
    %12 = vector.broadcast %cst_8 : f32 to vector<8x128xf32>
    %13 = arith.addf %12, %11 : vector<8x128xf32>
    %14 = math.log %13 : vector<8x128xf32>
    %cst_9 = arith.constant 0.000000e+00 : f32
    %15 = vector.broadcast %cst_9 : f32 to vector<8x128xf32>
    %16 = arith.minimumf %6, %15 : vector<8x128xf32>
    %17 = arith.subf %16, %14 : vector<8x128xf32>
    %cst_10 = arith.constant -9.21034049 : f32
    %cst_11 = arith.constant -1.000050e-04 : f32
    %18 = vector.broadcast %cst_10 : f32 to vector<8x128xf32>
    %19 = arith.maximumf %18, %17 : vector<8x128xf32>
    %20 = vector.broadcast %cst_11 : f32 to vector<8x128xf32>
    %21 = arith.minimumf %20, %19 : vector<8x128xf32>
    %cst_12 = arith.constant 0.000000e+00 : f32
    %22 = vector.broadcast %cst_12 : f32 to vector<8x128xf32>
    %23 = arith.maximumf %6, %22 : vector<8x128xf32>
    %cst_13 = arith.constant 0.000000e+00 : f32
    %24 = vector.broadcast %cst_13 : f32 to vector<8x128xf32>
    %25 = arith.subf %24, %23 : vector<8x128xf32>
    %26 = arith.subf %25, %14 : vector<8x128xf32>
    %cst_14 = arith.constant -9.21034049 : f32
    %cst_15 = arith.constant -1.000050e-04 : f32
    %27 = vector.broadcast %cst_14 : f32 to vector<8x128xf32>
    %28 = arith.maximumf %27, %26 : vector<8x128xf32>
    %29 = vector.broadcast %cst_15 : f32 to vector<8x128xf32>
    %30 = arith.minimumf %29, %28 : vector<8x128xf32>
    %cst_16 = arith.constant 0.000000e+00 : f32
    %31 = vector.broadcast %cst_16 : f32 to vector<8x128xf32>
    %32 = arith.cmpf oge, %6, %31 : vector<8x128xf32>
    %cst_17 = arith.constant 1.000000e+00 : f32
    %33 = vector.broadcast %cst_17 : f32 to vector<8x128xf32>
    %34 = arith.select %32, %33, %11 : vector<8x128xi1>, vector<8x128xf32>
    %cst_18 = arith.constant 1.000000e+00 : f32
    %35 = vector.broadcast %cst_18 : f32 to vector<8x128xf32>
    %36 = arith.addf %35, %11 : vector<8x128xf32>
    %37 = tpu.reciprocal %36 {approx = true} : vector<8x128xf32> -> vector<8x128xf32>
    %38 = arith.mulf %34, %37 : vector<8x128xf32>
    %cst_19 = arith.constant 9.99999974E-5 : f32
    %cst_20 = arith.constant 0.999899983 : f32
    %39 = vector.broadcast %cst_19 : f32 to vector<8x128xf32>
    %40 = arith.maximumf %39, %38 : vector<8x128xf32>
    %41 = vector.broadcast %cst_20 : f32 to vector<8x128xf32>
    %42 = arith.minimumf %41, %40 : vector<8x128xf32>
    %cst_21 = arith.constant 1.000000e+00 : f32
    %43 = vector.broadcast %cst_21 : f32 to vector<8x128xf32>
    %44 = arith.cmpf oeq, %7, %43 : vector<8x128xf32>
    %45 = arith.extui %44 : vector<8x128xi1> to vector<8x128xi32>
    %46 = arith.sitofp %45 : vector<8x128xi32> to vector<8x128xf32>
    %cst_22 = arith.constant 1.000000e+00 : f32
    %47 = vector.broadcast %cst_22 : f32 to vector<8x128xf32>
    %48 = arith.subf %47, %42 : vector<8x128xf32>
    %cst_23 = arith.constant 1.000000e+00 : f32
    %49 = vector.broadcast %cst_23 : f32 to vector<8x128xf32>
    %50 = arith.subf %49, %7 : vector<8x128xf32>
    %cst_24 = arith.constant 1.000000e+00 : f32
    %51 = vector.broadcast %cst_24 : f32 to vector<8x128xf32>
    %52 = arith.subf %51, %7 : vector<8x128xf32>
    %53 = arith.mulf %50, %52 : vector<8x128xf32>
    %54 = arith.mulf %53, %53 : vector<8x128xf32>
    %55 = arith.mulf %21, %48 : vector<8x128xf32>
    %56 = arith.mulf %55, %48 : vector<8x128xf32>
    %57 = arith.mulf %56, %46 : vector<8x128xf32>
    %58 = arith.mulf %30, %42 : vector<8x128xf32>
    %59 = arith.mulf %58, %42 : vector<8x128xf32>
    %60 = arith.mulf %59, %54 : vector<8x128xf32>
    %61 = arith.addf %57, %60 : vector<8x128xf32>
    %62 = vector.shape_cast %61 : vector<8x128xf32> to vector<1x8x128xf32>
    %cst_25 = arith.constant dense<0.000000e+00> : vector<1xf32>
    %63 = vector.multi_reduction <add>, %62, %cst_25 [1, 2] : vector<1x8x128xf32> to vector<1xf32>
    %64 = vector.shape_cast %63 : vector<1xf32> to vector<1x1x1xf32>
    %65 = vector.extract %64[0, 0, 0] : f32 from vector<1x1x1xf32>
    %66 = vector.broadcast %65 : f32 to vector<1x1xf32>
    %67 = vector.shape_cast %46 : vector<8x128xf32> to vector<1x8x128xf32>
    %cst_26 = arith.constant dense<0.000000e+00> : vector<1xf32>
    %68 = vector.multi_reduction <add>, %67, %cst_26 [1, 2] : vector<1x8x128xf32> to vector<1xf32>
    %69 = vector.shape_cast %68 : vector<1xf32> to vector<1x1x1xf32>
    %70 = vector.extract %69[0, 0, 0] : f32 from vector<1x1x1xf32>
    %71 = vector.broadcast %70 : f32 to vector<1x1xf32>
    %c0_i32_27 = arith.constant 0 : i32
    %72 = vector.broadcast %c0_i32_27 : i32 to vector<16x128xi32>
    %73 = arith.cmpi eq, %4, %72 : vector<16x128xi32>
    %cst_28 = arith.constant 0.000000e+00 : f32
    %74 = vector.shape_cast %66 : vector<1x1xf32> to vector<1x1xf32>
    %75 = vector.broadcast %74 : vector<1x1xf32> to vector<16x128xf32>
    %76 = vector.broadcast %cst_28 : f32 to vector<16x128xf32>
    %77 = arith.select %73, %75, %76 : vector<16x128xi1>, vector<16x128xf32>
    %78 = arith.addf %5, %77 : vector<16x128xf32>
    %c1_i32 = arith.constant 1 : i32
    %79 = vector.broadcast %c1_i32 : i32 to vector<16x128xi32>
    %80 = arith.cmpi eq, %4, %79 : vector<16x128xi32>
    %cst_29 = arith.constant 0.000000e+00 : f32
    %81 = vector.shape_cast %71 : vector<1x1xf32> to vector<1x1xf32>
    %82 = vector.broadcast %81 : vector<1x1xf32> to vector<16x128xf32>
    %83 = vector.broadcast %cst_29 : f32 to vector<16x128xf32>
    %84 = arith.select %80, %82, %83 : vector<16x128xi1>, vector<16x128xf32>
    %85 = arith.addf %78, %84 : vector<16x128xf32>
    %c0_30 = arith.constant 0 : index
    %c0_31 = arith.constant 0 : index
    %86 = vector.load %arg4[%c0_30, %c0_31] : memref<8x128xf32, #tpu.memory_space<vmem>>, vector<8x128xf32>
    %c0_32 = arith.constant 0 : index
    %c0_33 = arith.constant 0 : index
    %87 = vector.load %arg5[%c0_32, %c0_33] : memref<8x128xf32, #tpu.memory_space<vmem>>, vector<8x128xf32>
    %88 = math.absf %86 : vector<8x128xf32>
    %cst_34 = arith.constant 0.000000e+00 : f32
    %89 = vector.broadcast %cst_34 : f32 to vector<8x128xf32>
    %90 = arith.subf %89, %88 : vector<8x128xf32>
    %91 = math.exp %90 : vector<8x128xf32>
    %cst_35 = arith.constant 1.000000e+00 : f32
    %92 = vector.broadcast %cst_35 : f32 to vector<8x128xf32>
    %93 = arith.addf %92, %91 : vector<8x128xf32>
    %94 = math.log %93 : vector<8x128xf32>
    %cst_36 = arith.constant 0.000000e+00 : f32
    %95 = vector.broadcast %cst_36 : f32 to vector<8x128xf32>
    %96 = arith.minimumf %86, %95 : vector<8x128xf32>
    %97 = arith.subf %96, %94 : vector<8x128xf32>
    %cst_37 = arith.constant -9.21034049 : f32
    %cst_38 = arith.constant -1.000050e-04 : f32
    %98 = vector.broadcast %cst_37 : f32 to vector<8x128xf32>
    %99 = arith.maximumf %98, %97 : vector<8x128xf32>
    %100 = vector.broadcast %cst_38 : f32 to vector<8x128xf32>
    %101 = arith.minimumf %100, %99 : vector<8x128xf32>
    %cst_39 = arith.constant 0.000000e+00 : f32
    %102 = vector.broadcast %cst_39 : f32 to vector<8x128xf32>
    %103 = arith.maximumf %86, %102 : vector<8x128xf32>
    %cst_40 = arith.constant 0.000000e+00 : f32
    %104 = vector.broadcast %cst_40 : f32 to vector<8x128xf32>
    %105 = arith.subf %104, %103 : vector<8x128xf32>
    %106 = arith.subf %105, %94 : vector<8x128xf32>
    %cst_41 = arith.constant -9.21034049 : f32
    %cst_42 = arith.constant -1.000050e-04 : f32
    %107 = vector.broadcast %cst_41 : f32 to vector<8x128xf32>
    %108 = arith.maximumf %107, %106 : vector<8x128xf32>
    %109 = vector.broadcast %cst_42 : f32 to vector<8x128xf32>
    %110 = arith.minimumf %109, %108 : vector<8x128xf32>
    %cst_43 = arith.constant 0.000000e+00 : f32
    %111 = vector.broadcast %cst_43 : f32 to vector<8x128xf32>
    %112 = arith.cmpf oge, %86, %111 : vector<8x128xf32>
    %cst_44 = arith.constant 1.000000e+00 : f32
    %113 = vector.broadcast %cst_44 : f32 to vector<8x128xf32>
    %114 = arith.select %112, %113, %91 : vector<8x128xi1>, vector<8x128xf32>
    %cst_45 = arith.constant 1.000000e+00 : f32
    %115 = vector.broadcast %cst_45 : f32 to vector<8x128xf32>
    %116 = arith.addf %115, %91 : vector<8x128xf32>
    %117 = tpu.reciprocal %116 {approx = true} : vector<8x128xf32> -> vector<8x128xf32>
    %118 = arith.mulf %114, %117 : vector<8x128xf32>
    %cst_46 = arith.constant 9.99999974E-5 : f32
    %cst_47 = arith.constant 0.999899983 : f32
    %119 = vector.broadcast %cst_46 : f32 to vector<8x128xf32>
    %120 = arith.maximumf %119, %118 : vector<8x128xf32>
    %121 = vector.broadcast %cst_47 : f32 to vector<8x128xf32>
    %122 = arith.minimumf %121, %120 : vector<8x128xf32>
    %cst_48 = arith.constant 1.000000e+00 : f32
    %123 = vector.broadcast %cst_48 : f32 to vector<8x128xf32>
    %124 = arith.cmpf oeq, %87, %123 : vector<8x128xf32>
    %125 = arith.extui %124 : vector<8x128xi1> to vector<8x128xi32>
    %126 = arith.sitofp %125 : vector<8x128xi32> to vector<8x128xf32>
    %cst_49 = arith.constant 1.000000e+00 : f32
    %127 = vector.broadcast %cst_49 : f32 to vector<8x128xf32>
    %128 = arith.subf %127, %122 : vector<8x128xf32>
    %cst_50 = arith.constant 1.000000e+00 : f32
    %129 = vector.broadcast %cst_50 : f32 to vector<8x128xf32>
    %130 = arith.subf %129, %87 : vector<8x128xf32>
    %cst_51 = arith.constant 1.000000e+00 : f32
    %131 = vector.broadcast %cst_51 : f32 to vector<8x128xf32>
    %132 = arith.subf %131, %87 : vector<8x128xf32>
    %133 = arith.mulf %130, %132 : vector<8x128xf32>
    %134 = arith.mulf %133, %133 : vector<8x128xf32>
    %135 = arith.mulf %101, %128 : vector<8x128xf32>
    %136 = arith.mulf %135, %128 : vector<8x128xf32>
    %137 = arith.mulf %136, %126 : vector<8x128xf32>
    %138 = arith.mulf %110, %122 : vector<8x128xf32>
    %139 = arith.mulf %138, %122 : vector<8x128xf32>
    %140 = arith.mulf %139, %134 : vector<8x128xf32>
    %141 = arith.addf %137, %140 : vector<8x128xf32>
    %142 = vector.shape_cast %141 : vector<8x128xf32> to vector<1x8x128xf32>
    %cst_52 = arith.constant dense<0.000000e+00> : vector<1xf32>
    %143 = vector.multi_reduction <add>, %142, %cst_52 [1, 2] : vector<1x8x128xf32> to vector<1xf32>
    %144 = vector.shape_cast %143 : vector<1xf32> to vector<1x1x1xf32>
    %145 = vector.extract %144[0, 0, 0] : f32 from vector<1x1x1xf32>
    %146 = vector.broadcast %145 : f32 to vector<1x1xf32>
    %147 = vector.shape_cast %126 : vector<8x128xf32> to vector<1x8x128xf32>
    %cst_53 = arith.constant dense<0.000000e+00> : vector<1xf32>
    %148 = vector.multi_reduction <add>, %147, %cst_53 [1, 2] : vector<1x8x128xf32> to vector<1xf32>
    %149 = vector.shape_cast %148 : vector<1xf32> to vector<1x1x1xf32>
    %150 = vector.extract %149[0, 0, 0] : f32 from vector<1x1x1xf32>
    %151 = vector.broadcast %150 : f32 to vector<1x1xf32>
    %c2_i32 = arith.constant 2 : i32
    %152 = vector.broadcast %c2_i32 : i32 to vector<16x128xi32>
    %153 = arith.cmpi eq, %4, %152 : vector<16x128xi32>
    %cst_54 = arith.constant 0.000000e+00 : f32
    %154 = vector.shape_cast %146 : vector<1x1xf32> to vector<1x1xf32>
    %155 = vector.broadcast %154 : vector<1x1xf32> to vector<16x128xf32>
    %156 = vector.broadcast %cst_54 : f32 to vector<16x128xf32>
    %157 = arith.select %153, %155, %156 : vector<16x128xi1>, vector<16x128xf32>
    %158 = arith.addf %85, %157 : vector<16x128xf32>
    %c3_i32 = arith.constant 3 : i32
    %159 = vector.broadcast %c3_i32 : i32 to vector<16x128xi32>
    %160 = arith.cmpi eq, %4, %159 : vector<16x128xi32>
    %cst_55 = arith.constant 0.000000e+00 : f32
    %161 = vector.shape_cast %151 : vector<1x1xf32> to vector<1x1xf32>
    %162 = vector.broadcast %161 : vector<1x1xf32> to vector<16x128xf32>
    %163 = vector.broadcast %cst_55 : f32 to vector<16x128xf32>
    %164 = arith.select %160, %162, %163 : vector<16x128xi1>, vector<16x128xf32>
    %165 = arith.addf %158, %164 : vector<16x128xf32>
    %c0_56 = arith.constant 0 : index
    %c0_57 = arith.constant 0 : index
    %166 = vector.load %arg6[%c0_56, %c0_57] : memref<8x128xf32, #tpu.memory_space<vmem>>, vector<8x128xf32>
    %c0_58 = arith.constant 0 : index
    %c0_59 = arith.constant 0 : index
    %167 = vector.load %arg7[%c0_58, %c0_59] : memref<8x128xf32, #tpu.memory_space<vmem>>, vector<8x128xf32>
    %168 = math.absf %166 : vector<8x128xf32>
    %cst_60 = arith.constant 0.000000e+00 : f32
    %169 = vector.broadcast %cst_60 : f32 to vector<8x128xf32>
    %170 = arith.subf %169, %168 : vector<8x128xf32>
    %171 = math.exp %170 : vector<8x128xf32>
    %cst_61 = arith.constant 1.000000e+00 : f32
    %172 = vector.broadcast %cst_61 : f32 to vector<8x128xf32>
    %173 = arith.addf %172, %171 : vector<8x128xf32>
    %174 = math.log %173 : vector<8x128xf32>
    %cst_62 = arith.constant 0.000000e+00 : f32
    %175 = vector.broadcast %cst_62 : f32 to vector<8x128xf32>
    %176 = arith.minimumf %166, %175 : vector<8x128xf32>
    %177 = arith.subf %176, %174 : vector<8x128xf32>
    %cst_63 = arith.constant -9.21034049 : f32
    %cst_64 = arith.constant -1.000050e-04 : f32
    %178 = vector.broadcast %cst_63 : f32 to vector<8x128xf32>
    %179 = arith.maximumf %178, %177 : vector<8x128xf32>
    %180 = vector.broadcast %cst_64 : f32 to vector<8x128xf32>
    %181 = arith.minimumf %180, %179 : vector<8x128xf32>
    %cst_65 = arith.constant 0.000000e+00 : f32
    %182 = vector.broadcast %cst_65 : f32 to vector<8x128xf32>
    %183 = arith.maximumf %166, %182 : vector<8x128xf32>
    %cst_66 = arith.constant 0.000000e+00 : f32
    %184 = vector.broadcast %cst_66 : f32 to vector<8x128xf32>
    %185 = arith.subf %184, %183 : vector<8x128xf32>
    %186 = arith.subf %185, %174 : vector<8x128xf32>
    %cst_67 = arith.constant -9.21034049 : f32
    %cst_68 = arith.constant -1.000050e-04 : f32
    %187 = vector.broadcast %cst_67 : f32 to vector<8x128xf32>
    %188 = arith.maximumf %187, %186 : vector<8x128xf32>
    %189 = vector.broadcast %cst_68 : f32 to vector<8x128xf32>
    %190 = arith.minimumf %189, %188 : vector<8x128xf32>
    %cst_69 = arith.constant 0.000000e+00 : f32
    %191 = vector.broadcast %cst_69 : f32 to vector<8x128xf32>
    %192 = arith.cmpf oge, %166, %191 : vector<8x128xf32>
    %cst_70 = arith.constant 1.000000e+00 : f32
    %193 = vector.broadcast %cst_70 : f32 to vector<8x128xf32>
    %194 = arith.select %192, %193, %171 : vector<8x128xi1>, vector<8x128xf32>
    %cst_71 = arith.constant 1.000000e+00 : f32
    %195 = vector.broadcast %cst_71 : f32 to vector<8x128xf32>
    %196 = arith.addf %195, %171 : vector<8x128xf32>
    %197 = tpu.reciprocal %196 {approx = true} : vector<8x128xf32> -> vector<8x128xf32>
    %198 = arith.mulf %194, %197 : vector<8x128xf32>
    %cst_72 = arith.constant 9.99999974E-5 : f32
    %cst_73 = arith.constant 0.999899983 : f32
    %199 = vector.broadcast %cst_72 : f32 to vector<8x128xf32>
    %200 = arith.maximumf %199, %198 : vector<8x128xf32>
    %201 = vector.broadcast %cst_73 : f32 to vector<8x128xf32>
    %202 = arith.minimumf %201, %200 : vector<8x128xf32>
    %cst_74 = arith.constant 1.000000e+00 : f32
    %203 = vector.broadcast %cst_74 : f32 to vector<8x128xf32>
    %204 = arith.cmpf oeq, %167, %203 : vector<8x128xf32>
    %205 = arith.extui %204 : vector<8x128xi1> to vector<8x128xi32>
    %206 = arith.sitofp %205 : vector<8x128xi32> to vector<8x128xf32>
    %cst_75 = arith.constant 1.000000e+00 : f32
    %207 = vector.broadcast %cst_75 : f32 to vector<8x128xf32>
    %208 = arith.subf %207, %202 : vector<8x128xf32>
    %cst_76 = arith.constant 1.000000e+00 : f32
    %209 = vector.broadcast %cst_76 : f32 to vector<8x128xf32>
    %210 = arith.subf %209, %167 : vector<8x128xf32>
    %cst_77 = arith.constant 1.000000e+00 : f32
    %211 = vector.broadcast %cst_77 : f32 to vector<8x128xf32>
    %212 = arith.subf %211, %167 : vector<8x128xf32>
    %213 = arith.mulf %210, %212 : vector<8x128xf32>
    %214 = arith.mulf %213, %213 : vector<8x128xf32>
    %215 = arith.mulf %181, %208 : vector<8x128xf32>
    %216 = arith.mulf %215, %208 : vector<8x128xf32>
    %217 = arith.mulf %216, %206 : vector<8x128xf32>
    %218 = arith.mulf %190, %202 : vector<8x128xf32>
    %219 = arith.mulf %218, %202 : vector<8x128xf32>
    %220 = arith.mulf %219, %214 : vector<8x128xf32>
    %221 = arith.addf %217, %220 : vector<8x128xf32>
    %222 = vector.shape_cast %221 : vector<8x128xf32> to vector<1x8x128xf32>
    %cst_78 = arith.constant dense<0.000000e+00> : vector<1xf32>
    %223 = vector.multi_reduction <add>, %222, %cst_78 [1, 2] : vector<1x8x128xf32> to vector<1xf32>
    %224 = vector.shape_cast %223 : vector<1xf32> to vector<1x1x1xf32>
    %225 = vector.extract %224[0, 0, 0] : f32 from vector<1x1x1xf32>
    %226 = vector.broadcast %225 : f32 to vector<1x1xf32>
    %227 = vector.shape_cast %206 : vector<8x128xf32> to vector<1x8x128xf32>
    %cst_79 = arith.constant dense<0.000000e+00> : vector<1xf32>
    %228 = vector.multi_reduction <add>, %227, %cst_79 [1, 2] : vector<1x8x128xf32> to vector<1xf32>
    %229 = vector.shape_cast %228 : vector<1xf32> to vector<1x1x1xf32>
    %230 = vector.extract %229[0, 0, 0] : f32 from vector<1x1x1xf32>
    %231 = vector.broadcast %230 : f32 to vector<1x1xf32>
    %c4_i32 = arith.constant 4 : i32
    %232 = vector.broadcast %c4_i32 : i32 to vector<16x128xi32>
    %233 = arith.cmpi eq, %4, %232 : vector<16x128xi32>
    %cst_80 = arith.constant 0.000000e+00 : f32
    %234 = vector.shape_cast %226 : vector<1x1xf32> to vector<1x1xf32>
    %235 = vector.broadcast %234 : vector<1x1xf32> to vector<16x128xf32>
    %236 = vector.broadcast %cst_80 : f32 to vector<16x128xf32>
    %237 = arith.select %233, %235, %236 : vector<16x128xi1>, vector<16x128xf32>
    %238 = arith.addf %165, %237 : vector<16x128xf32>
    %c5_i32 = arith.constant 5 : i32
    %239 = vector.broadcast %c5_i32 : i32 to vector<16x128xi32>
    %240 = arith.cmpi eq, %4, %239 : vector<16x128xi32>
    %cst_81 = arith.constant 0.000000e+00 : f32
    %241 = vector.shape_cast %231 : vector<1x1xf32> to vector<1x1xf32>
    %242 = vector.broadcast %241 : vector<1x1xf32> to vector<16x128xf32>
    %243 = vector.broadcast %cst_81 : f32 to vector<16x128xf32>
    %244 = arith.select %240, %242, %243 : vector<16x128xi1>, vector<16x128xf32>
    %245 = arith.addf %238, %244 : vector<16x128xf32>
    %246 = vector.shape_cast %245 : vector<16x128xf32> to vector<1x16x128xf32>
    %247 = arith.addf %3, %246 : vector<1x16x128xf32>
    %c0_82 = arith.constant 0 : index
    %c0_83 = arith.constant 0 : index
    %c0_84 = arith.constant 0 : index
    %248 = vector.load %arg17[%c0_82, %c0_83, %c0_84] : memref<1x16x128xf32, #tpu.memory_space<vmem>>, vector<1x16x128xf32>
    tpu.vector_store %arg17[%c0_82, %c0_83, %c0_84], %247 {strides = array<i32>} : memref<1x16x128xf32, #tpu.memory_space<vmem>>, vector<1x16x128xf32>,
    %c0_i32_85 = arith.constant 0 : i32
    %249 = arith.cmpi eq, %arg0, %c0_i32_85 : i32
    %c0_i32_86 = arith.constant 0 : i32
    %250 = arith.cmpi eq, %arg1, %c0_i32_86 : i32
    %251 = arith.andi %249, %250 : i1
    %252 = arith.extui %251 : i1 to i32
    %c0_i32_87 = arith.constant 0 : i32
    %253 = arith.cmpi ne, %252, %c0_i32_87 : i32
    scf.if %253 {
      %c0_88 = arith.constant 0 : index
      %c0_89 = arith.constant 0 : index
      %254 = vector.load %arg8[%c0_88, %c0_89] : memref<2x8xf32, #tpu.memory_space<vmem>>, vector<2x8xf32>
      %c0_90 = arith.constant 0 : index
      %c0_91 = arith.constant 0 : index
      %255 = vector.load %arg9[%c0_90, %c0_91] : memref<2x8xf32, #tpu.memory_space<vmem>>, vector<2x8xf32>
      %c0_92 = arith.constant 0 : index
      %c0_93 = arith.constant 0 : index
      %256 = vector.load %arg10[%c0_92, %c0_93] : memref<2x8xf32, #tpu.memory_space<vmem>>, vector<2x8xf32>
      %cst_94 = arith.constant dense<0.000000e+00> : vector<2xf32>
      %257 = vector.multi_reduction <add>, %256, %cst_94 [1] : vector<2x8xf32> to vector<2xf32>
      %258 = vector.shape_cast %257 : vector<2xf32> to vector<2x1xf32>
      %cst_95 = arith.constant 9.99999974E-5 : f32
      %259 = vector.broadcast %cst_95 : f32 to vector<2x1xf32>
      %260 = arith.addf %258, %259 : vector<2x1xf32>
      %cst_96 = arith.constant 1.000000e+00 : f32
      %261 = vector.broadcast %cst_96 : f32 to vector<2x1xf32>
      %262 = arith.divf %261, %260 : vector<2x1xf32>
      %263 = arith.addf %254, %255 : vector<2x8xf32>
      %cst_97 = arith.constant 5.000000e-01 : f32
      %264 = vector.broadcast %cst_97 : f32 to vector<2x8xf32>
      %265 = arith.mulf %263, %264 : vector<2x8xf32>
      %266 = arith.subf %254, %265 : vector<2x8xf32>
      %267 = arith.subf %255, %265 : vector<2x8xf32>
      %268 = arith.mulf %266, %266 : vector<2x8xf32>
      %269 = arith.mulf %267, %267 : vector<2x8xf32>
      %270 = arith.addf %268, %269 : vector<2x8xf32>
      %271 = arith.mulf %270, %256 : vector<2x8xf32>
      %272 = vector.broadcast %262 : vector<2x1xf32> to vector<2x8xf32>
      %273 = arith.mulf %271, %272 : vector<2x8xf32>
      %274 = vector.shape_cast %273 : vector<2x8xf32> to vector<1x2x8xf32>
      %cst_98 = arith.constant dense<0.000000e+00> : vector<1xf32>
      %275 = vector.multi_reduction <add>, %274, %cst_98 [1, 2] : vector<1x2x8xf32> to vector<1xf32>
      %276 = vector.shape_cast %275 : vector<1xf32> to vector<1x1x1xf32>
      %277 = vector.extract %276[0, 0, 0] : f32 from vector<1x1x1xf32>
      %278 = vector.broadcast %277 : f32 to vector<1x1xf32>
      %c0_99 = arith.constant 0 : index
      %c0_100 = arith.constant 0 : index
      %279 = vector.load %arg11[%c0_99, %c0_100] : memref<8x2xf32, #tpu.memory_space<vmem>>, vector<8x2xf32>
      %c0_101 = arith.constant 0 : index
      %c0_102 = arith.constant 0 : index
      %280 = vector.load %arg12[%c0_101, %c0_102] : memref<8x2xf32, #tpu.memory_space<vmem>>, vector<8x2xf32>
      %c0_103 = arith.constant 0 : index
      %c0_104 = arith.constant 0 : index
      %281 = vector.load %arg13[%c0_103, %c0_104] : memref<8x2xf32, #tpu.memory_space<vmem>>, vector<8x2xf32>
      %282 = arith.addf %279, %280 : vector<8x2xf32>
      %cst_105 = arith.constant 5.000000e-01 : f32
      %283 = vector.broadcast %cst_105 : f32 to vector<8x2xf32>
      %284 = arith.mulf %282, %283 : vector<8x2xf32>
      %cst_106 = arith.constant 0.000000e+00 : f32
      %285 = vector.broadcast %cst_106 : f32 to vector<1x1xf32>
      %286 = vector.extract_strided_slice %265 {offsets = [0, 0], sizes = [1, 8], strides = [1, 1]} : vector<2x8xf32> to vector<1x8xf32>
      %287 = vector.extract_strided_slice %284 {offsets = [0, 0], sizes = [8, 1], strides = [1, 1]} : vector<8x2xf32> to vector<8x1xf32>
      %288 = vector.extract_strided_slice %256 {offsets = [0, 0], sizes = [1, 8], strides = [1, 1]} : vector<2x8xf32> to vector<1x8xf32>
      %289 = vector.extract_strided_slice %281 {offsets = [0, 0], sizes = [8, 1], strides = [1, 1]} : vector<8x2xf32> to vector<8x1xf32>
      %290 = vector.extract_strided_slice %258 {offsets = [0, 0], sizes = [1, 1], strides = [1, 1]} : vector<2x1xf32> to vector<1x1xf32>
      %291 = vector.extract_strided_slice %262 {offsets = [0, 0], sizes = [1, 1], strides = [1, 1]} : vector<2x1xf32> to vector<1x1xf32>
      %292 = vector.broadcast %286 : vector<1x8xf32> to vector<8x8xf32>
      %293 = vector.broadcast %287 : vector<8x1xf32> to vector<8x8xf32>
      %294 = arith.subf %292, %293 : vector<8x8xf32>
      %295 = math.absf %294 : vector<8x8xf32>
      %cst_107 = arith.constant 1.000000e+00 : f32
      %296 = vector.broadcast %cst_107 : f32 to vector<8x8xf32>
      %297 = arith.subf %296, %295 : vector<8x8xf32>
      %cst_108 = arith.constant 0.000000e+00 : f32
      %298 = vector.broadcast %cst_108 : f32 to vector<8x8xf32>
      %299 = arith.maximumf %297, %298 : vector<8x8xf32>
      %300 = vector.broadcast %291 : vector<1x1xf32> to vector<8x8xf32>
      %301 = arith.subf %299, %300 : vector<8x8xf32>
      %cst_109 = arith.constant 1.000000e+00 : f32
      %302 = vector.broadcast %cst_109 : f32 to vector<1x1xf32>
      %303 = arith.subf %290, %302 : vector<1x1xf32>
      %304 = arith.mulf %303, %290 : vector<1x1xf32>
      %cst_110 = arith.constant 9.99999974E-5 : f32
      %305 = vector.broadcast %cst_110 : f32 to vector<1x1xf32>
      %306 = arith.addf %304, %305 : vector<1x1xf32>
      %307 = vector.broadcast %306 : vector<1x1xf32> to vector<8x8xf32>
      %308 = arith.divf %301, %307 : vector<8x8xf32>
      %309 = vector.broadcast %288 : vector<1x8xf32> to vector<8x8xf32>
      %310 = vector.broadcast %289 : vector<8x1xf32> to vector<8x8xf32>
      %311 = arith.mulf %309, %310 : vector<8x8xf32>
      %312 = arith.mulf %308, %311 : vector<8x8xf32>
      %313 = vector.shape_cast %312 : vector<8x8xf32> to vector<1x8x8xf32>
      %cst_111 = arith.constant dense<0.000000e+00> : vector<1xf32>
      %314 = vector.multi_reduction <add>, %313, %cst_111 [1, 2] : vector<1x8x8xf32> to vector<1xf32>
      %315 = vector.shape_cast %314 : vector<1xf32> to vector<1x1x1xf32>
      %316 = vector.extract %315[0, 0, 0] : f32 from vector<1x1x1xf32>
      %317 = vector.broadcast %316 : f32 to vector<1x1xf32>
      %318 = arith.addf %285, %317 : vector<1x1xf32>
      %319 = vector.extract_strided_slice %265 {offsets = [1, 0], sizes = [1, 8], strides = [1, 1]} : vector<2x8xf32> to vector<1x8xf32>
      %320 = vector.extract_strided_slice %284 {offsets = [0, 1], sizes = [8, 1], strides = [1, 1]} : vector<8x2xf32> to vector<8x1xf32>
      %321 = vector.extract_strided_slice %256 {offsets = [1, 0], sizes = [1, 8], strides = [1, 1]} : vector<2x8xf32> to vector<1x8xf32>
      %322 = vector.extract_strided_slice %281 {offsets = [0, 1], sizes = [8, 1], strides = [1, 1]} : vector<8x2xf32> to vector<8x1xf32>
      %323 = vector.extract_strided_slice %258 {offsets = [1, 0], sizes = [1, 1], strides = [1, 1]} : vector<2x1xf32> to vector<1x1xf32>
      %324 = vector.extract_strided_slice %262 {offsets = [1, 0], sizes = [1, 1], strides = [1, 1]} : vector<2x1xf32> to vector<1x1xf32>
      %325 = vector.broadcast %319 : vector<1x8xf32> to vector<8x8xf32>
      %326 = vector.broadcast %320 : vector<8x1xf32> to vector<8x8xf32>
      %327 = arith.subf %325, %326 : vector<8x8xf32>
      %328 = math.absf %327 : vector<8x8xf32>
      %cst_112 = arith.constant 1.000000e+00 : f32
      %329 = vector.broadcast %cst_112 : f32 to vector<8x8xf32>
      %330 = arith.subf %329, %328 : vector<8x8xf32>
      %cst_113 = arith.constant 0.000000e+00 : f32
      %331 = vector.broadcast %cst_113 : f32 to vector<8x8xf32>
      %332 = arith.maximumf %330, %331 : vector<8x8xf32>
      %333 = vector.broadcast %324 : vector<1x1xf32> to vector<8x8xf32>
      %334 = arith.subf %332, %333 : vector<8x8xf32>
      %cst_114 = arith.constant 1.000000e+00 : f32
      %335 = vector.broadcast %cst_114 : f32 to vector<1x1xf32>
      %336 = arith.subf %323, %335 : vector<1x1xf32>
      %337 = arith.mulf %336, %323 : vector<1x1xf32>
      %cst_115 = arith.constant 9.99999974E-5 : f32
      %338 = vector.broadcast %cst_115 : f32 to vector<1x1xf32>
      %339 = arith.addf %337, %338 : vector<1x1xf32>
      %340 = vector.broadcast %339 : vector<1x1xf32> to vector<8x8xf32>
      %341 = arith.divf %334, %340 : vector<8x8xf32>
      %342 = vector.broadcast %321 : vector<1x8xf32> to vector<8x8xf32>
      %343 = vector.broadcast %322 : vector<8x1xf32> to vector<8x8xf32>
      %344 = arith.mulf %342, %343 : vector<8x8xf32>
      %345 = arith.mulf %341, %344 : vector<8x8xf32>
      %346 = vector.shape_cast %345 : vector<8x8xf32> to vector<1x8x8xf32>
      %cst_116 = arith.constant dense<0.000000e+00> : vector<1xf32>
      %347 = vector.multi_reduction <add>, %346, %cst_116 [1, 2] : vector<1x8x8xf32> to vector<1xf32>
      %348 = vector.shape_cast %347 : vector<1xf32> to vector<1x1x1xf32>
      %349 = vector.extract %348[0, 0, 0] : f32 from vector<1x1x1xf32>
      %350 = vector.broadcast %349 : f32 to vector<1x1xf32>
      %351 = arith.addf %318, %350 : vector<1x1xf32>
      %c0_117 = arith.constant 0 : index
      %c0_118 = arith.constant 0 : index
      %352 = vector.load %arg14[%c0_117, %c0_118] : memref<6x16xf32, #tpu.memory_space<vmem>>, vector<6x16xf32>
      %c0_119 = arith.constant 0 : index
      %c0_120 = arith.constant 0 : index
      %353 = vector.load %arg15[%c0_119, %c0_120] : memref<6x16xf32, #tpu.memory_space<vmem>>, vector<6x16xf32>
      %c0_121 = arith.constant 0 : index
      %c0_122 = arith.constant 0 : index
      %354 = vector.load %arg16[%c0_121, %c0_122] : memref<1x16xf32, #tpu.memory_space<vmem>>, vector<1x16xf32>
      %355 = arith.subf %352, %353 : vector<6x16xf32>
      %356 = math.absf %355 : vector<6x16xf32>
      %cst_123 = arith.constant 1.000000e+00 : f32
      %357 = vector.broadcast %cst_123 : f32 to vector<6x16xf32>
      %358 = arith.cmpf olt, %356, %357 : vector<6x16xf32>
      %cst_124 = arith.constant 5.000000e-01 : f32
      %359 = vector.broadcast %cst_124 : f32 to vector<6x16xf32>
      %360 = arith.mulf %359, %356 : vector<6x16xf32>
      %361 = arith.mulf %360, %356 : vector<6x16xf32>
      %cst_125 = arith.constant 5.000000e-01 : f32
      %362 = vector.broadcast %cst_125 : f32 to vector<6x16xf32>
      %363 = arith.subf %356, %362 : vector<6x16xf32>
      %364 = arith.select %358, %361, %363 : vector<6x16xi1>, vector<6x16xf32>
      %365 = vector.broadcast %354 : vector<1x16xf32> to vector<6x16xf32>
      %366 = arith.mulf %364, %365 : vector<6x16xf32>
      %367 = vector.shape_cast %366 : vector<6x16xf32> to vector<1x6x16xf32>
      %cst_126 = arith.constant dense<0.000000e+00> : vector<1xf32>
      %368 = vector.multi_reduction <add>, %367, %cst_126 [1, 2] : vector<1x6x16xf32> to vector<1xf32>
      %369 = vector.shape_cast %368 : vector<1xf32> to vector<1x1x1xf32>
      %370 = vector.extract %369[0, 0, 0] : f32 from vector<1x1x1xf32>
      %371 = vector.broadcast %370 : f32 to vector<1x1xf32>
      %372 = vector.shape_cast %354 : vector<1x16xf32> to vector<1x1x16xf32>
      %cst_127 = arith.constant dense<0.000000e+00> : vector<1xf32>
      %373 = vector.multi_reduction <add>, %372, %cst_127 [1, 2] : vector<1x1x16xf32> to vector<1xf32>
      %374 = vector.shape_cast %373 : vector<1xf32> to vector<1x1x1xf32>
      %375 = vector.extract %374[0, 0, 0] : f32 from vector<1x1x1xf32>
      %376 = vector.broadcast %375 : f32 to vector<1x1xf32>
      %377 = tpu.iota {dimensions = array<i32: 0>} : vector<16x128xi32>
      %c8_i32 = arith.constant 8 : i32
      %378 = vector.broadcast %c8_i32 : i32 to vector<16x128xi32>
      %379 = arith.cmpi eq, %377, %378 : vector<16x128xi32>
      %cst_128 = arith.constant 0.000000e+00 : f32
      %380 = vector.shape_cast %278 : vector<1x1xf32> to vector<1x1xf32>
      %381 = vector.broadcast %380 : vector<1x1xf32> to vector<16x128xf32>
      %382 = vector.broadcast %cst_128 : f32 to vector<16x128xf32>
      %383 = arith.select %379, %381, %382 : vector<16x128xi1>, vector<16x128xf32>
      %c9_i32 = arith.constant 9 : i32
      %384 = vector.broadcast %c9_i32 : i32 to vector<16x128xi32>
      %385 = arith.cmpi eq, %377, %384 : vector<16x128xi32>
      %cst_129 = arith.constant 0.000000e+00 : f32
      %386 = vector.shape_cast %351 : vector<1x1xf32> to vector<1x1xf32>
      %387 = vector.broadcast %386 : vector<1x1xf32> to vector<16x128xf32>
      %388 = vector.broadcast %cst_129 : f32 to vector<16x128xf32>
      %389 = arith.select %385, %387, %388 : vector<16x128xi1>, vector<16x128xf32>
      %390 = arith.addf %383, %389 : vector<16x128xf32>
      %c10_i32 = arith.constant 10 : i32
      %391 = vector.broadcast %c10_i32 : i32 to vector<16x128xi32>
      %392 = arith.cmpi eq, %377, %391 : vector<16x128xi32>
      %cst_130 = arith.constant 0.000000e+00 : f32
      %393 = vector.shape_cast %371 : vector<1x1xf32> to vector<1x1xf32>
      %394 = vector.broadcast %393 : vector<1x1xf32> to vector<16x128xf32>
      %395 = vector.broadcast %cst_130 : f32 to vector<16x128xf32>
      %396 = arith.select %392, %394, %395 : vector<16x128xi1>, vector<16x128xf32>
      %397 = arith.addf %390, %396 : vector<16x128xf32>
      %c11_i32 = arith.constant 11 : i32
      %398 = vector.broadcast %c11_i32 : i32 to vector<16x128xi32>
      %399 = arith.cmpi eq, %377, %398 : vector<16x128xi32>
      %cst_131 = arith.constant 0.000000e+00 : f32
      %400 = vector.shape_cast %376 : vector<1x1xf32> to vector<1x1xf32>
      %401 = vector.broadcast %400 : vector<1x1xf32> to vector<16x128xf32>
      %402 = vector.broadcast %cst_131 : f32 to vector<16x128xf32>
      %403 = arith.select %399, %401, %402 : vector<16x128xi1>, vector<16x128xf32>
      %404 = arith.addf %397, %403 : vector<16x128xf32>
      %c0_132 = arith.constant 0 : index
      %c0_133 = arith.constant 0 : index
      %c0_134 = arith.constant 0 : index
      %405 = vector.load %arg17[%c0_132, %c0_133, %c0_134] : memref<1x16x128xf32, #tpu.memory_space<vmem>>, vector<1x16x128xf32>
      %406 = vector.shape_cast %404 : vector<16x128xf32> to vector<1x16x128xf32>
      %407 = arith.addf %405, %406 : vector<1x16x128xf32>
      %c0_135 = arith.constant 0 : index
      %c0_136 = arith.constant 0 : index
      %c0_137 = arith.constant 0 : index
      %408 = vector.load %arg17[%c0_135, %c0_136, %c0_137] : memref<1x16x128xf32, #tpu.memory_space<vmem>>, vector<1x16x128xf32>
      tpu.vector_store %arg17[%c0_135, %c0_136, %c0_137], %407 {strides = array<i32>} : memref<1x16x128xf32, #tpu.memory_space<vmem>>, vector<1x16x128xf32>,
    } else {
    }
    return
  }
  func.func @transform_0(%arg0: i32, %arg1: i32) -> (i32, i32) {
    %c1_i32 = arith.constant 1 : i32
    %0 = arith.muli %arg0, %c1_i32 : i32
    %1 = arith.addi %0, %arg1 : i32
    %c0_i32 = arith.constant 0 : i32
    %c0_i32_0 = arith.constant 0 : i32
    return %1, %c0_i32 : i32, i32
  }
  func.func @transform_1(%arg0: i32, %arg1: i32) -> (i32, i32) {
    %c1_i32 = arith.constant 1 : i32
    %0 = arith.muli %arg0, %c1_i32 : i32
    %1 = arith.addi %0, %arg1 : i32
    %c0_i32 = arith.constant 0 : i32
    %c0_i32_0 = arith.constant 0 : i32
    return %1, %c0_i32 : i32, i32
  }
  func.func @transform_2(%arg0: i32, %arg1: i32) -> (i32, i32) {
    %c1_i32 = arith.constant 1 : i32
    %0 = arith.muli %arg0, %c1_i32 : i32
    %1 = arith.addi %0, %arg1 : i32
    %c0_i32 = arith.constant 0 : i32
    %c0_i32_0 = arith.constant 0 : i32
    return %1, %c0_i32 : i32, i32
  }
  func.func @transform_3(%arg0: i32, %arg1: i32) -> (i32, i32) {
    %c1_i32 = arith.constant 1 : i32
    %0 = arith.muli %arg0, %c1_i32 : i32
    %1 = arith.addi %0, %arg1 : i32
    %c0_i32 = arith.constant 0 : i32
    %c0_i32_0 = arith.constant 0 : i32
    return %1, %c0_i32 : i32, i32
  }
  func.func @transform_4(%arg0: i32, %arg1: i32) -> (i32, i32) {
    %c1_i32 = arith.constant 1 : i32
    %0 = arith.muli %arg0, %c1_i32 : i32
    %1 = arith.addi %0, %arg1 : i32
    %c0_i32 = arith.constant 0 : i32
    %c0_i32_0 = arith.constant 0 : i32
    return %1, %c0_i32 : i32, i32
  }
  func.func @transform_5(%arg0: i32, %arg1: i32) -> (i32, i32) {
    %c1_i32 = arith.constant 1 : i32
    %0 = arith.muli %arg0, %c1_i32 : i32
    %1 = arith.addi %0, %arg1 : i32
    %c0_i32 = arith.constant 0 : i32
    %c0_i32_0 = arith.constant 0 : i32
    return %1, %c0_i32 : i32, i32
  }
  func.func @transform_6(%arg0: i32, %arg1: i32) -> (i32, i32) {
    %c0_i32 = arith.constant 0 : i32
    %c0_i32_0 = arith.constant 0 : i32
    %c0_i32_1 = arith.constant 0 : i32
    return %c0_i32, %c0_i32_0 : i32, i32
  }
  func.func @transform_7(%arg0: i32, %arg1: i32) -> (i32, i32) {
    %c0_i32 = arith.constant 0 : i32
    %c0_i32_0 = arith.constant 0 : i32
    %c0_i32_1 = arith.constant 0 : i32
    return %c0_i32, %c0_i32_0 : i32, i32
  }
  func.func @transform_8(%arg0: i32, %arg1: i32) -> (i32, i32) {
    %c0_i32 = arith.constant 0 : i32
    %c0_i32_0 = arith.constant 0 : i32
    %c0_i32_1 = arith.constant 0 : i32
    return %c0_i32, %c0_i32_0 : i32, i32
  }
  func.func @transform_9(%arg0: i32, %arg1: i32) -> (i32, i32) {
    %c0_i32 = arith.constant 0 : i32
    %c0_i32_0 = arith.constant 0 : i32
    %c0_i32_1 = arith.constant 0 : i32
    return %c0_i32, %c0_i32_0 : i32, i32
  }
  func.func @transform_10(%arg0: i32, %arg1: i32) -> (i32, i32) {
    %c0_i32 = arith.constant 0 : i32
    %c0_i32_0 = arith.constant 0 : i32
    %c0_i32_1 = arith.constant 0 : i32
    return %c0_i32, %c0_i32_0 : i32, i32
  }
  func.func @transform_11(%arg0: i32, %arg1: i32) -> (i32, i32) {
    %c0_i32 = arith.constant 0 : i32
    %c0_i32_0 = arith.constant 0 : i32
    %c0_i32_1 = arith.constant 0 : i32
    return %c0_i32, %c0_i32_0 : i32, i32
  }
  func.func @transform_12(%arg0: i32, %arg1: i32) -> (i32, i32) {
    %c0_i32 = arith.constant 0 : i32
    %c0_i32_0 = arith.constant 0 : i32
    %c0_i32_1 = arith.constant 0 : i32
    return %c0_i32, %c0_i32_0 : i32, i32
  }
  func.func @transform_13(%arg0: i32, %arg1: i32) -> (i32, i32) {
    %c0_i32 = arith.constant 0 : i32
    %c0_i32_0 = arith.constant 0 : i32
    %c0_i32_1 = arith.constant 0 : i32
    return %c0_i32, %c0_i32_0 : i32, i32
  }
  func.func @transform_14(%arg0: i32, %arg1: i32) -> (i32, i32) {
    %c0_i32 = arith.constant 0 : i32
    %c0_i32_0 = arith.constant 0 : i32
    %c0_i32_1 = arith.constant 0 : i32
    return %c0_i32, %c0_i32_0 : i32, i32
  }
  func.func @transform_15(%arg0: i32, %arg1: i32) -> (i32, i32, i32) {
    %c0_i32 = arith.constant 0 : i32
    %c0_i32_0 = arith.constant 0 : i32
    %c0_i32_1 = arith.constant 0 : i32
    return %arg0, %c0_i32, %c0_i32_0 : i32, i32, i32
  }
}

</mosaic_0001>

<llo_original>
// kernel: tpu_custom_call.1
$region0: #{tpu_custom_call.1}
  #allocation0 [shape = 'u32[]', space=smem, size = 0x4, offset = 0x4, fixed_abs, tag = 'smem constant byte address 0x4 - core index']
  #allocation1 [shape = 'u32[144,128]{1,0:T(1,128)}', space=vmem, size = 0x12000, scoped, tag = 'internal scratch']
  %s0 = inlined_call_operand.vmem [shape: f32[16,128], index: 0, kind: input, shape index: {}]
  %s1 = inlined_call_operand.vmem [shape: f32[16,128], index: 1, kind: input, shape index: {}]
  %s2 = inlined_call_operand.hbm [shape: f32[16,128], index: 2, kind: input, shape index: {}]
  %s3 = inlined_call_operand.hbm [shape: f32[16,128], index: 3, kind: input, shape index: {}]
  %s4 = inlined_call_operand.hbm [shape: f32[16,128], index: 4, kind: input, shape index: {}]
  %s5 = inlined_call_operand.vmem [shape: f32[16,128], index: 5, kind: input, shape index: {}]
  %s6 = inlined_call_operand.hbm [shape: f32[2,8], index: 6, kind: input, shape index: {}]
  %s7 = inlined_call_operand.hbm [shape: f32[2,8], index: 7, kind: input, shape index: {}]
  %s8 = inlined_call_operand.hbm [shape: f32[2,8], index: 8, kind: input, shape index: {}]
  %s9 = inlined_call_operand.vmem [shape: f32[8,2], index: 9, kind: input, shape index: {}]
  %s10 = inlined_call_operand.vmem [shape: f32[8,2], index: 10, kind: input, shape index: {}]
  %s11 = inlined_call_operand.vmem [shape: f32[8,2], index: 11, kind: input, shape index: {}]
  %s12 = inlined_call_operand.vmem [shape: f32[6,16], index: 12, kind: input, shape index: {}]
  %s13 = inlined_call_operand.vmem [shape: f32[6,16], index: 13, kind: input, shape index: {}]
  %s14 = inlined_call_operand.vmem [shape: f32[1,16], index: 14, kind: input, shape index: {}]
  %s15 = inlined_call_operand.hbm [shape: f32[2,16,128], index: 15, kind: output, shape index: {}]
  %s16 = sld [smem:[#allocation0]]
  $region125: #{tpu_custom_call.1} parent=0
    _
  %s18 = ssub.s32 1, %s16
  %s19 = scalar_select 0, %s18, %s16
  $region1: #{tpu_custom_call.1} parent=0
    #allocation2 [shape = 'u8[8192]{0}', space=vmem, size = 0x2000, scoped, tag = 'input window, operand 2']
    #allocation3 [shape = 's32[2]{0}', space=sflag, size = 0x8, scoped, tag = 'scoped memory for tpu_custom_call.1']
    #allocation4 [shape = 's32[2]{0}', space=sflag, size = 0x8, scoped, tag = 'scoped memory for tpu_custom_call.1']
    #allocation5 [shape = 'u8[8192]{0}', space=vmem, size = 0x2000, scoped, tag = 'input window, operand 3']
    #allocation6 [shape = 's32[2]{0}', space=sflag, size = 0x8, scoped, tag = 'scoped memory for tpu_custom_call.1']
    #allocation7 [shape = 'u8[8192]{0}', space=vmem, size = 0x2000, scoped, tag = 'input window, operand 4']
    #allocation8 [shape = 'u8[1024]{0}', space=vmem, size = 0x400, scoped, tag = 'input window, operand 6, single buffered']
    #allocation9 [shape = 's32[1]{0}', space=sflag, size = 0x4, scoped, tag = 'scoped memory for tpu_custom_call.1']
    #allocation10 [shape = 'u8[1024]{0}', space=vmem, size = 0x400, scoped, tag = 'input window, operand 7, single buffered']
    #allocation11 [shape = 'u8[1024]{0}', space=vmem, size = 0x400, scoped, tag = 'input window, operand 8, single buffered']
    #allocation12 [shape = 's32[1]{0}', space=sflag, size = 0x4, scoped, tag = 'scoped memory for tpu_custom_call.1']
    #allocation13 [shape = 'u8[16384]{0}', space=vmem, size = 0x4000, scoped, tag = 'output window, operand 0']
    %20 = vsyncpa [#allocation3], 0
    %s21 = scalar_lea.sflag [#allocation3], 1
    %22 = vsyncpa %s21, 0
    %23 = vsyncpa [#allocation6], 0
    %s24 = scalar_lea.sflag [#allocation6], 1
    %25 = vsyncpa %s24, 0
    %26 = vsyncpa [#allocation9], 0
    %27 = vsyncpa [#allocation12], 0
    %28 = vsyncpa [#allocation4], 0
    %s29 = scalar_lea.sflag [#allocation4], 1
    %30 = vsyncpa %s29, 0
    loop: start=0, step=1, limit=4
    $region2: #{tpu_custom_call.1} parent=1 // loop_pre_header
      _
    $region3: #{tpu_custom_call.1} parent=1 // loop_header
      %s32 = sphi 0, %s36
      %p33 = scmp.ge.s32.totalorder %s32, 4
      %s39 = sphi 0, %s51
      %s40 = sphi 0, %s47
      %s41 = sphi 0, %s39
      %s42 = sphi 0, %s40
      %s43 = sphi 0, %s41
      %s44 = sphi 0, %s42
      %s56 = sphi 0, %s58
      %s59 = sphi 0, %s56
      %s60 = sphi 0, %s59
      %s76 = sphi 0, %s60
      %s84 = sphi 0, %s86
      %s87 = sphi 0, %s84
      %s88 = sphi 0, %s87
      %s104 = sphi 0, %s88
      %s112 = sphi 0, %s114
      %s115 = sphi 0, %s112
      %s116 = sphi 0, %s115
      %s132 = sphi 0, %s116
      %s140 = sphi 0, %s142
      %s143 = sphi 0, %s140
      %s144 = sphi 0, %s143
      %s160 = sphi 0, %s144
      %s168 = sphi 0, %s170
      %s171 = sphi 0, %s168
      %s172 = sphi 0, %s171
      %s188 = sphi 0, %s172
      %s196 = sphi 0, %s198
      %s199 = sphi 0, %s196
      %s200 = sphi 0, %s199
      %s216 = sphi 0, %s200
      %s220 = sphi 0, %s220
      %s222 = sphi 0, %s220
      %s223 = sphi 0, %s222
      %s237 = sphi 0, %s223
      %s241 = sphi 0, %s241
      %s243 = sphi 0, %s241
      %s244 = sphi 0, %s243
      %s258 = sphi 0, %s244
      %s262 = sphi 0, %s262
      %s264 = sphi 0, %s262
      %s265 = sphi 0, %s264
      %s279 = sphi 0, %s265
      %s283 = sphi 0, %s283
      %s285 = sphi 0, %s283
      %s286 = sphi 0, %s285
      %s300 = sphi 0, %s286
      %s304 = sphi 0, %s304
      %s306 = sphi 0, %s304
      %s307 = sphi 0, %s306
      %s321 = sphi 0, %s307
      %s325 = sphi 0, %s325
      %s327 = sphi 0, %s325
      %s328 = sphi 0, %s327
      %s342 = sphi 0, %s328
      %s346 = sphi 0, %s346
      %s348 = sphi 0, %s346
      %s349 = sphi 0, %s348
      %s363 = sphi 0, %s349
      %s367 = sphi 0, %s367
      %s369 = sphi 0, %s367
      %s370 = sphi 0, %s369
      %s384 = sphi 0, %s370
      %s388 = sphi 0, %s388
      %s390 = sphi 0, %s388
      %s391 = sphi 0, %s390
      %s405 = sphi 0, %s391
      %s411 = sphi 0, %s413
      %s414 = sphi 0, %s411
      %s415 = sphi 0, %s414
      %s431 = sphi 0, %s415
    $region4: #{tpu_custom_call.1} parent=1 // loop_header_branch
      %35 = sbr.rel (%p33) target = $region8
    $region5: #{tpu_custom_call.1} parent=1 // loop_body
      %s37 = ssub.s32 %s32, 1
      %s38 = ssub.s32 %s32, 2
      %s45 = sadd.s32 1, %s40
      %p46 = scmp.ge.s32.totalorder %s45, 1
      %s47 = scalar_select %p46, 0, %s45
      %s48 = sadd.s32 1, %s39
      %s49 = scalar_select %p46, %s48, %s39
      %p50 = scmp.ge.s32.totalorder %s49, 2
      %s51 = scalar_select %p50, 0, %s49
      %s52 = sadd.s32 %s39, %s40
      %s53 = sadd.s32 %s51, %s47
      %s54 = ssub.s32 %s52, %s53
      %p55 = scmp.eq.s32.totalorder %s54, 0
      %s57 = sadd.s32 %s56, 1
      %s58 = scalar_select %p55, %s56, %s57
      %p61 = pneg %p55
      %p62 = scmp.eq.s32.totalorder %s32, 1
      %p63 = por %p61, %p62
      %p64 = scmp.ne.s32.totalorder %s56, %s59
      %p65 = scmp.eq.s32.totalorder %s32, 0
      %p66 = por %p64, %p65
      %p67 = scmp.ne.s32.totalorder %s56, %s59
      %p68 = scmp.eq.s32.totalorder %s37, 1
      %p69 = por %p67, %p68
      %p70 = scmp.ne.s32.totalorder %s59, %s60
      %p71 = scmp.eq.s32.totalorder %s37, 0
      %p72 = por %p70, %p71
      %p73 = scmp.ne.s32.totalorder %s59, %s60
      %p74 = scmp.eq.s32.totalorder %s38, 1
      %p75 = por %p73, %p74
      %p77 = scmp.ne.s32.totalorder %s60, %s76
      %p78 = scmp.eq.s32.totalorder %s38, 0
      %p79 = por %p77, %p78
      %s80 = sadd.s32 %s39, %s40
      %s81 = sadd.s32 %s51, %s47
      %s82 = ssub.s32 %s80, %s81
      %p83 = scmp.eq.s32.totalorder %s82, 0
      %s85 = sadd.s32 %s84, 1
      %s86 = scalar_select %p83, %s84, %s85
      %p89 = pneg %p83
      %p90 = scmp.eq.s32.totalorder %s32, 1
      %p91 = por %p89, %p90
      %p92 = scmp.ne.s32.totalorder %s84, %s87
      %p93 = scmp.eq.s32.totalorder %s32, 0
      %p94 = por %p92, %p93
      %p95 = scmp.ne.s32.totalorder %s84, %s87
      %p96 = scmp.eq.s32.totalorder %s37, 1
      %p97 = por %p95, %p96
      %p98 = scmp.ne.s32.totalorder %s87, %s88
      %p99 = scmp.eq.s32.totalorder %s37, 0
      %p100 = por %p98, %p99
      %p101 = scmp.ne.s32.totalorder %s87, %s88
      %p102 = scmp.eq.s32.totalorder %s38, 1
      %p103 = por %p101, %p102
      %p105 = scmp.ne.s32.totalorder %s88, %s104
      %p106 = scmp.eq.s32.totalorder %s38, 0
      %p107 = por %p105, %p106
      %s108 = sadd.s32 %s39, %s40
      %s109 = sadd.s32 %s51, %s47
      %s110 = ssub.s32 %s108, %s109
      %p111 = scmp.eq.s32.totalorder %s110, 0
      %s113 = sadd.s32 %s112, 1
      %s114 = scalar_select %p111, %s112, %s113
      %p117 = pneg %p111
      %p118 = scmp.eq.s32.totalorder %s32, 1
      %p119 = por %p117, %p118
      %p120 = scmp.ne.s32.totalorder %s112, %s115
      %p121 = scmp.eq.s32.totalorder %s32, 0
      %p122 = por %p120, %p121
      %p123 = scmp.ne.s32.totalorder %s112, %s115
      %p124 = scmp.eq.s32.totalorder %s37, 1
      %p125 = por %p123, %p124
      %p126 = scmp.ne.s32.totalorder %s115, %s116
      %p127 = scmp.eq.s32.totalorder %s37, 0
      %p128 = por %p126, %p127
      %p129 = scmp.ne.s32.totalorder %s115, %s116
      %p130 = scmp.eq.s32.totalorder %s38, 1
      %p131 = por %p129, %p130
      %p133 = scmp.ne.s32.totalorder %s116, %s132
      %p134 = scmp.eq.s32.totalorder %s38, 0
      %p135 = por %p133, %p134
      %s136 = sadd.s32 %s39, %s40
      %s137 = sadd.s32 %s51, %s47
      %s138 = ssub.s32 %s136, %s137
      %p139 = scmp.eq.s32.totalorder %s138, 0
      %s141 = sadd.s32 %s140, 1
      %s142 = scalar_select %p139, %s140, %s141
      %p145 = pneg %p139
      %p146 = scmp.eq.s32.totalorder %s32, 1
      %p147 = por %p145, %p146
      %p148 = scmp.ne.s32.totalorder %s140, %s143
      %p149 = scmp.eq.s32.totalorder %s32, 0
      %p150 = por %p148, %p149
      %p151 = scmp.ne.s32.totalorder %s140, %s143
      %p152 = scmp.eq.s32.totalorder %s37, 1
      %p153 = por %p151, %p152
      %p154 = scmp.ne.s32.totalorder %s143, %s144
      %p155 = scmp.eq.s32.totalorder %s37, 0
      %p156 = por %p154, %p155
      %p157 = scmp.ne.s32.totalorder %s143, %s144
      %p158 = scmp.eq.s32.totalorder %s38, 1
      %p159 = por %p157, %p158
      %p161 = scmp.ne.s32.totalorder %s144, %s160
      %p162 = scmp.eq.s32.totalorder %s38, 0
      %p163 = por %p161, %p162
      %s164 = sadd.s32 %s39, %s40
      %s165 = sadd.s32 %s51, %s47
      %s166 = ssub.s32 %s164, %s165
      %p167 = scmp.eq.s32.totalorder %s166, 0
      %s169 = sadd.s32 %s168, 1
      %s170 = scalar_select %p167, %s168, %s169
      %p173 = pneg %p167
      %p174 = scmp.eq.s32.totalorder %s32, 1
      %p175 = por %p173, %p174
      %p176 = scmp.ne.s32.totalorder %s168, %s171
      %p177 = scmp.eq.s32.totalorder %s32, 0
      %p178 = por %p176, %p177
      %p179 = scmp.ne.s32.totalorder %s168, %s171
      %p180 = scmp.eq.s32.totalorder %s37, 1
      %p181 = por %p179, %p180
      %p182 = scmp.ne.s32.totalorder %s171, %s172
      %p183 = scmp.eq.s32.totalorder %s37, 0
      %p184 = por %p182, %p183
      %p185 = scmp.ne.s32.totalorder %s171, %s172
      %p186 = scmp.eq.s32.totalorder %s38, 1
      %p187 = por %p185, %p186
      %p189 = scmp.ne.s32.totalorder %s172, %s188
      %p190 = scmp.eq.s32.totalorder %s38, 0
      %p191 = por %p189, %p190
      %s192 = sadd.s32 %s39, %s40
      %s193 = sadd.s32 %s51, %s47
      %s194 = ssub.s32 %s192, %s193
      %p195 = scmp.eq.s32.totalorder %s194, 0
      %s197 = sadd.s32 %s196, 1
      %s198 = scalar_select %p195, %s196, %s197
      %p201 = pneg %p195
      %p202 = scmp.eq.s32.totalorder %s32, 1
      %p203 = por %p201, %p202
      %p204 = scmp.ne.s32.totalorder %s196, %s199
      %p205 = scmp.eq.s32.totalorder %s32, 0
      %p206 = por %p204, %p205
      %p207 = scmp.ne.s32.totalorder %s196, %s199
      %p208 = scmp.eq.s32.totalorder %s37, 1
      %p209 = por %p207, %p208
      %p210 = scmp.ne.s32.totalorder %s199, %s200
      %p211 = scmp.eq.s32.totalorder %s37, 0
      %p212 = por %p210, %p211
      %p213 = scmp.ne.s32.totalorder %s199, %s200
      %p214 = scmp.eq.s32.totalorder %s38, 1
      %p215 = por %p213, %p214
      %p217 = scmp.ne.s32.totalorder %s200, %s216
      %p218 = scmp.eq.s32.totalorder %s38, 0
      %p219 = por %p217, %p218
      %s221 = sadd.s32 %s220, 1
      %p224 = scmp.eq.s32.totalorder %s32, 1
      %p225 = scmp.ne.s32.totalorder %s220, %s222
      %p226 = scmp.eq.s32.totalorder %s32, 0
      %p227 = por %p225, %p226
      %p228 = scmp.ne.s32.totalorder %s220, %s222
      %p229 = scmp.eq.s32.totalorder %s37, 1
      %p230 = por %p228, %p229
      %p231 = scmp.ne.s32.totalorder %s222, %s223
      %p232 = scmp.eq.s32.totalorder %s37, 0
      %p233 = por %p231, %p232
      %p234 = scmp.ne.s32.totalorder %s222, %s223
      %p235 = scmp.eq.s32.totalorder %s38, 1
      %p236 = por %p234, %p235
      %p238 = scmp.ne.s32.totalorder %s223, %s237
      %p239 = scmp.eq.s32.totalorder %s38, 0
      %p240 = por %p238, %p239
      %s242 = sadd.s32 %s241, 1
      %p245 = scmp.eq.s32.totalorder %s32, 1
      %p246 = scmp.ne.s32.totalorder %s241, %s243
      %p247 = scmp.eq.s32.totalorder %s32, 0
      %p248 = por %p246, %p247
      %p249 = scmp.ne.s32.totalorder %s241, %s243
      %p250 = scmp.eq.s32.totalorder %s37, 1
      %p251 = por %p249, %p250
      %p252 = scmp.ne.s32.totalorder %s243, %s244
      %p253 = scmp.eq.s32.totalorder %s37, 0
      %p254 = por %p252, %p253
      %p255 = scmp.ne.s32.totalorder %s243, %s244
      %p256 = scmp.eq.s32.totalorder %s38, 1
      %p257 = por %p255, %p256
      %p259 = scmp.ne.s32.totalorder %s244, %s258
      %p260 = scmp.eq.s32.totalorder %s38, 0
      %p261 = por %p259, %p260
      %s263 = sadd.s32 %s262, 1
      %p266 = scmp.eq.s32.totalorder %s32, 1
      %p267 = scmp.ne.s32.totalorder %s262, %s264
      %p268 = scmp.eq.s32.totalorder %s32, 0
      %p269 = por %p267, %p268
      %p270 = scmp.ne.s32.totalorder %s262, %s264
      %p271 = scmp.eq.s32.totalorder %s37, 1
      %p272 = por %p270, %p271
      %p273 = scmp.ne.s32.totalorder %s264, %s265
      %p274 = scmp.eq.s32.totalorder %s37, 0
      %p275 = por %p273, %p274
      %p276 = scmp.ne.s32.totalorder %s264, %s265
      %p277 = scmp.eq.s32.totalorder %s38, 1
      %p278 = por %p276, %p277
      %p280 = scmp.ne.s32.totalorder %s265, %s279
      %p281 = scmp.eq.s32.totalorder %s38, 0
      %p282 = por %p280, %p281
      %s284 = sadd.s32 %s283, 1
      %p287 = scmp.eq.s32.totalorder %s32, 1
      %p288 = scmp.ne.s32.totalorder %s283, %s285
      %p289 = scmp.eq.s32.totalorder %s32, 0
      %p290 = por %p288, %p289
      %p291 = scmp.ne.s32.totalorder %s283, %s285
      %p292 = scmp.eq.s32.totalorder %s37, 1
      %p293 = por %p291, %p292
      %p294 = scmp.ne.s32.totalorder %s285, %s286
      %p295 = scmp.eq.s32.totalorder %s37, 0
      %p296 = por %p294, %p295
      %p297 = scmp.ne.s32.totalorder %s285, %s286
      %p298 = scmp.eq.s32.totalorder %s38, 1
      %p299 = por %p297, %p298
      %p301 = scmp.ne.s32.totalorder %s286, %s300
      %p302 = scmp.eq.s32.totalorder %s38, 0
      %p303 = por %p301, %p302
      %s305 = sadd.s32 %s304, 1
      %p308 = scmp.eq.s32.totalorder %s32, 1
      %p309 = scmp.ne.s32.totalorder %s304, %s306
      %p310 = scmp.eq.s32.totalorder %s32, 0
      %p311 = por %p309, %p310
      %p312 = scmp.ne.s32.totalorder %s304, %s306
      %p313 = scmp.eq.s32.totalorder %s37, 1
      %p314 = por %p312, %p313
      %p315 = scmp.ne.s32.totalorder %s306, %s307
      %p316 = scmp.eq.s32.totalorder %s37, 0
      %p317 = por %p315, %p316
      %p318 = scmp.ne.s32.totalorder %s306, %s307
      %p319 = scmp.eq.s32.totalorder %s38, 1
      %p320 = por %p318, %p319
      %p322 = scmp.ne.s32.totalorder %s307, %s321
      %p323 = scmp.eq.s32.totalorder %s38, 0
      %p324 = por %p322, %p323
      %s326 = sadd.s32 %s325, 1
      %p329 = scmp.eq.s32.totalorder %s32, 1
      %p330 = scmp.ne.s32.totalorder %s325, %s327
      %p331 = scmp.eq.s32.totalorder %s32, 0
      %p332 = por %p330, %p331
      %p333 = scmp.ne.s32.totalorder %s325, %s327
      %p334 = scmp.eq.s32.totalorder %s37, 1
      %p335 = por %p333, %p334
      %p336 = scmp.ne.s32.totalorder %s327, %s328
      %p337 = scmp.eq.s32.totalorder %s37, 0
      %p338 = por %p336, %p337
      %p339 = scmp.ne.s32.totalorder %s327, %s328
      %p340 = scmp.eq.s32.totalorder %s38, 1
      %p341 = por %p339, %p340
      %p343 = scmp.ne.s32.totalorder %s328, %s342
      %p344 = scmp.eq.s32.totalorder %s38, 0
      %p345 = por %p343, %p344
      %s347 = sadd.s32 %s346, 1
      %p350 = scmp.eq.s32.totalorder %s32, 1
      %p351 = scmp.ne.s32.totalorder %s346, %s348
      %p352 = scmp.eq.s32.totalorder %s32, 0
      %p353 = por %p351, %p352
      %p354 = scmp.ne.s32.totalorder %s346, %s348
      %p355 = scmp.eq.s32.totalorder %s37, 1
      %p356 = por %p354, %p355
      %p357 = scmp.ne.s32.totalorder %s348, %s349
      %p358 = scmp.eq.s32.totalorder %s37, 0
      %p359 = por %p357, %p358
      %p360 = scmp.ne.s32.totalorder %s348, %s349
      %p361 = scmp.eq.s32.totalorder %s38, 1
      %p362 = por %p360, %p361
      %p364 = scmp.ne.s32.totalorder %s349, %s363
      %p365 = scmp.eq.s32.totalorder %s38, 0
      %p366 = por %p364, %p365
      %s368 = sadd.s32 %s367, 1
      %p371 = scmp.eq.s32.totalorder %s32, 1
      %p372 = scmp.ne.s32.totalorder %s367, %s369
      %p373 = scmp.eq.s32.totalorder %s32, 0
      %p374 = por %p372, %p373
      %p375 = scmp.ne.s32.totalorder %s367, %s369
      %p376 = scmp.eq.s32.totalorder %s37, 1
      %p377 = por %p375, %p376
      %p378 = scmp.ne.s32.totalorder %s369, %s370
      %p379 = scmp.eq.s32.totalorder %s37, 0
      %p380 = por %p378, %p379
      %p381 = scmp.ne.s32.totalorder %s369, %s370
      %p382 = scmp.eq.s32.totalorder %s38, 1
      %p383 = por %p381, %p382
      %p385 = scmp.ne.s32.totalorder %s370, %s384
      %p386 = scmp.eq.s32.totalorder %s38, 0
      %p387 = por %p385, %p386
      %s389 = sadd.s32 %s388, 1
      %p392 = scmp.eq.s32.totalorder %s32, 1
      %p393 = scmp.ne.s32.totalorder %s388, %s390
      %p394 = scmp.eq.s32.totalorder %s32, 0
      %p395 = por %p393, %p394
      %p396 = scmp.ne.s32.totalorder %s388, %s390
      %p397 = scmp.eq.s32.totalorder %s37, 1
      %p398 = por %p396, %p397
      %p399 = scmp.ne.s32.totalorder %s390, %s391
      %p400 = scmp.eq.s32.totalorder %s37, 0
      %p401 = por %p399, %p400
      %p402 = scmp.ne.s32.totalorder %s390, %s391
      %p403 = scmp.eq.s32.totalorder %s38, 1
      %p404 = por %p402, %p403
      %p406 = scmp.ne.s32.totalorder %s391, %s405
      %p407 = scmp.eq.s32.totalorder %s38, 0
      %p408 = por %p406, %p407
      %s409 = ssub.s32 %s39, %s51
      %p410 = scmp.eq.s32.totalorder %s409, 0
      %s412 = sadd.s32 %s411, 1
      %s413 = scalar_select %p410, %s411, %s412
      %p416 = pneg %p410
      %p417 = scmp.eq.s32.totalorder %s32, 1
      %p418 = por %p416, %p417
      %p419 = scmp.ne.s32.totalorder %s411, %s414
      %p420 = scmp.eq.s32.totalorder %s32, 0
      %p421 = por %p419, %p420
      %p422 = scmp.ne.s32.totalorder %s411, %s414
      %p423 = scmp.eq.s32.totalorder %s37, 1
      %p424 = por %p422, %p423
      %p425 = scmp.ne.s32.totalorder %s414, %s415
      %p426 = scmp.eq.s32.totalorder %s37, 0
      %p427 = por %p425, %p426
      %p428 = scmp.ne.s32.totalorder %s414, %s415
      %p429 = scmp.eq.s32.totalorder %s38, 1
      %p430 = por %p428, %p429
      %p432 = scmp.ne.s32.totalorder %s415, %s431
      %p433 = scmp.eq.s32.totalorder %s38, 0
      %p434 = por %p432, %p433
      %p435 = scmp.le.s32.totalorder 1, %s32
      %p436 = scmp.lt.s32.totalorder %s32, 3
      %p437 = pnand %p435, %p436
      %p438 = pneg %p437
      // Predicated region
      $region9: #{tpu_custom_call.1} parent=5 // pred_check
        _
      $region10: #{tpu_custom_call.1} parent=5 // pred_check_branch
        %440 = sbr.rel (%p437) target = $region12
      $region11: #{tpu_custom_call.1} parent=5 // pred_region
        %s441 = ssub.s32 %s32, 1
        // Predicated region
        $region13: #{tpu_custom_call.1} parent=11 // pred_check
          %p442 = pneg %p233
        $region14: #{tpu_custom_call.1} parent=11 // pred_check_branch
          %444 = sbr.rel (%p442) target = $region16
        $region15: #{tpu_custom_call.1} parent=11 // pred_region
          %s446 = ssub.s32 32, 32
          %447 = vsyncadd [#allocation9], %s446
          %s449 = sshll.u32 [#allocation8], 4
          %s450 = int_to_ptr.vmem [resolvable:$true] %s449
          %452 = dma.hbm_to_vmem [thread:$0]  %s6, 32, %s450, [#allocation9]
        $region16: #{tpu_custom_call.1} parent=11 // pred_fallthru
          _
        // Predicated region
        $region17: #{tpu_custom_call.1} parent=11 // pred_check
          %p453 = pneg %p254
        $region18: #{tpu_custom_call.1} parent=11 // pred_check_branch
          %455 = sbr.rel (%p453) target = $region20
        $region19: #{tpu_custom_call.1} parent=11 // pred_region
          %s457 = ssub.s32 32, 32
          %458 = vsyncadd [#allocation9], %s457
          %s460 = sshll.u32 [#allocation10], 4
          %s461 = int_to_ptr.vmem [resolvable:$true] %s460
          %463 = dma.hbm_to_vmem [thread:$0]  %s7, 32, %s461, [#allocation9]
        $region20: #{tpu_custom_call.1} parent=11 // pred_fallthru
          _
        // Predicated region
        $region21: #{tpu_custom_call.1} parent=11 // pred_check
          %p464 = pneg %p275
        $region22: #{tpu_custom_call.1} parent=11 // pred_check_branch
          %466 = sbr.rel (%p464) target = $region24
        $region23: #{tpu_custom_call.1} parent=11 // pred_region
          %s468 = ssub.s32 32, 32
          %469 = vsyncadd [#allocation12], %s468
          %s471 = sshll.u32 [#allocation11], 4
          %s472 = int_to_ptr.vmem [resolvable:$true] %s471
          %474 = dma.hbm_to_vmem [thread:$0]  %s8, 32, %s472, [#allocation12]
        $region24: #{tpu_custom_call.1} parent=11 // pred_fallthru
          _
        // Predicated region
        $region25: #{tpu_custom_call.1} parent=11 // pred_check
          %p475 = pneg %p296
        $region26: #{tpu_custom_call.1} parent=11 // pred_check_branch
          %477 = sbr.rel (%p475) target = $region28
        $region27: #{tpu_custom_call.1} parent=11 // pred_region
          _
        $region28: #{tpu_custom_call.1} parent=11 // pred_fallthru
          _
        // Predicated region
        $region29: #{tpu_custom_call.1} parent=11 // pred_check
          %p478 = pneg %p317
        $region30: #{tpu_custom_call.1} parent=11 // pred_check_branch
          %480 = sbr.rel (%p478) target = $region32
        $region31: #{tpu_custom_call.1} parent=11 // pred_region
          _
        $region32: #{tpu_custom_call.1} parent=11 // pred_fallthru
          _
        // Predicated region
        $region33: #{tpu_custom_call.1} parent=11 // pred_check
          %p481 = pneg %p338
        $region34: #{tpu_custom_call.1} parent=11 // pred_check_branch
          %483 = sbr.rel (%p481) target = $region36
        $region35: #{tpu_custom_call.1} parent=11 // pred_region
          _
        $region36: #{tpu_custom_call.1} parent=11 // pred_fallthru
          _
        // Predicated region
        $region37: #{tpu_custom_call.1} parent=11 // pred_check
          %p484 = pneg %p359
        $region38: #{tpu_custom_call.1} parent=11 // pred_check_branch
          %486 = sbr.rel (%p484) target = $region40
        $region39: #{tpu_custom_call.1} parent=11 // pred_region
          _
        $region40: #{tpu_custom_call.1} parent=11 // pred_fallthru
          _
        // Predicated region
        $region41: #{tpu_custom_call.1} parent=11 // pred_check
          %p487 = pneg %p380
        $region42: #{tpu_custom_call.1} parent=11 // pred_check_branch
          %489 = sbr.rel (%p487) target = $region44
        $region43: #{tpu_custom_call.1} parent=11 // pred_region
          _
        $region44: #{tpu_custom_call.1} parent=11 // pred_fallthru
          _
        // Predicated region
        $region45: #{tpu_custom_call.1} parent=11 // pred_check
          %p490 = pneg %p401
        $region46: #{tpu_custom_call.1} parent=11 // pred_check_branch
          %492 = sbr.rel (%p490) target = $region48
        $region47: #{tpu_custom_call.1} parent=11 // pred_region
          _
        $region48: #{tpu_custom_call.1} parent=11 // pred_fallthru
          _
      $region12: #{tpu_custom_call.1} parent=5 // pred_fallthru
        _
      %p493 = scmp.lt.s32.totalorder %s32, 2
      // Predicated region
      $region49: #{tpu_custom_call.1} parent=5 // pred_check
        %p494 = pneg %p493
      $region50: #{tpu_custom_call.1} parent=5 // pred_check_branch
        %496 = sbr.rel (%p494) target = $region52
      $region51: #{tpu_custom_call.1} parent=5 // pred_region
        // Predicated region
        $region53: #{tpu_custom_call.1} parent=51 // pred_check
          %p497 = pneg %p66
        $region54: #{tpu_custom_call.1} parent=51 // pred_check_branch
          %499 = sbr.rel (%p497) target = $region56
        $region55: #{tpu_custom_call.1} parent=51 // pred_region
          %s500 = sadd.s32 %s39, %s40
          %p501 = scmp.lt.s32.totalorder %s500, 1
          %s502 = scalar_select %p501, %s500, 1
          %s503 = smul.addr %s502, 8
          %s504 = scalar_lea.vmem %s0, %s503
          %s505 = sadd.s32 %s39, %s40
        $region56: #{tpu_custom_call.1} parent=51 // pred_fallthru
          _
        // Predicated region
        $region57: #{tpu_custom_call.1} parent=51 // pred_check
          %p506 = pneg %p94
        $region58: #{tpu_custom_call.1} parent=51 // pred_check_branch
          %508 = sbr.rel (%p506) target = $region60
        $region59: #{tpu_custom_call.1} parent=51 // pred_region
          %s509 = sadd.s32 %s39, %s40
          %p510 = scmp.lt.s32.totalorder %s509, 1
          %s511 = scalar_select %p510, %s509, 1
          %s512 = smul.addr %s511, 8
          %s513 = scalar_lea.vmem %s1, %s512
          %s514 = sadd.s32 %s39, %s40
        $region60: #{tpu_custom_call.1} parent=51 // pred_fallthru
          _
        // Predicated region
        $region61: #{tpu_custom_call.1} parent=51 // pred_check
          %p515 = pneg %p122
        $region62: #{tpu_custom_call.1} parent=51 // pred_check_branch
          %517 = sbr.rel (%p515) target = $region64
        $region63: #{tpu_custom_call.1} parent=51 // pred_region
          %s518 = sand.u32 %s112, 1
          %s519 = scalar_lea.sflag [#allocation3], %s518
          %s520 = sand.u32 %s112, 1
          %s521 = smul.addr %s520, 8
          %s522 = scalar_lea.vmem [#allocation2], %s521
          %s523 = sadd.s32 %s39, %s40
          %s525 = ssub.s32 128, 128
          %526 = vsyncadd %s519, %s525
          %s527 = smul.addr %s523, 128
          %s528 = scalar_lea.hbm %s2, %s527
          %s530 = sshll.u32 %s522, 4
          %s531 = int_to_ptr.vmem [resolvable:$true] %s530
          %533 = dma.hbm_to_vmem [thread:$0]  %s528, 128, %s531, %s519
        $region64: #{tpu_custom_call.1} parent=51 // pred_fallthru
          _
        // Predicated region
        $region65: #{tpu_custom_call.1} parent=51 // pred_check
          %p534 = pneg %p150
        $region66: #{tpu_custom_call.1} parent=51 // pred_check_branch
          %536 = sbr.rel (%p534) target = $region68
        $region67: #{tpu_custom_call.1} parent=51 // pred_region
          %s537 = sand.u32 %s32, 1
          %s538 = scalar_lea.sflag [#allocation6], %s537
          %s539 = sand.u32 %s140, 1
          %s540 = smul.addr %s539, 8
          %s541 = scalar_lea.vmem [#allocation5], %s540
          %s542 = sadd.s32 %s39, %s40
          %s544 = ssub.s32 128, 128
          %545 = vsyncadd %s538, %s544
          %s546 = smul.addr %s542, 128
          %s547 = scalar_lea.hbm %s3, %s546
          %s549 = sshll.u32 %s541, 4
          %s550 = int_to_ptr.vmem [resolvable:$true] %s549
          %552 = dma.hbm_to_vmem [thread:$0]  %s547, 128, %s550, %s538
        $region68: #{tpu_custom_call.1} parent=51 // pred_fallthru
          _
        // Predicated region
        $region69: #{tpu_custom_call.1} parent=51 // pred_check
          %p553 = pneg %p178
        $region70: #{tpu_custom_call.1} parent=51 // pred_check_branch
          %555 = sbr.rel (%p553) target = $region72
        $region71: #{tpu_custom_call.1} parent=51 // pred_region
          %s556 = sand.u32 %s32, 1
          %s557 = scalar_lea.sflag [#allocation6], %s556
          %s558 = sand.u32 %s168, 1
          %s559 = smul.addr %s558, 8
          %s560 = scalar_lea.vmem [#allocation7], %s559
          %s561 = sadd.s32 %s39, %s40
          %s563 = ssub.s32 128, 128
          %564 = vsyncadd %s557, %s563
          %s565 = smul.addr %s561, 128
          %s566 = scalar_lea.hbm %s4, %s565
          %s568 = sshll.u32 %s560, 4
          %s569 = int_to_ptr.vmem [resolvable:$true] %s568
          %571 = dma.hbm_to_vmem [thread:$0]  %s566, 128, %s569, %s557
        $region72: #{tpu_custom_call.1} parent=51 // pred_fallthru
          _
        // Predicated region
        $region73: #{tpu_custom_call.1} parent=51 // pred_check
          %p572 = pneg %p206
        $region74: #{tpu_custom_call.1} parent=51 // pred_check_branch
          %574 = sbr.rel (%p572) target = $region76
        $region75: #{tpu_custom_call.1} parent=51 // pred_region
          %s575 = sadd.s32 %s39, %s40
          %p576 = scmp.lt.s32.totalorder %s575, 1
          %s577 = scalar_select %p576, %s575, 1
          %s578 = smul.addr %s577, 8
          %s579 = scalar_lea.vmem %s5, %s578
          %s580 = sadd.s32 %s39, %s40
        $region76: #{tpu_custom_call.1} parent=51 // pred_fallthru
          _
      $region52: #{tpu_custom_call.1} parent=5 // pred_fallthru
        _
      %p581 = scmp.le.s32.totalorder 1, %s32
      %p582 = scmp.lt.s32.totalorder %s32, 3
      %p583 = pnand %p581, %p582
      %p584 = pneg %p583
      // Predicated region
      $region77: #{tpu_custom_call.1} parent=5 // pred_check
        _
      $region78: #{tpu_custom_call.1} parent=5 // pred_check_branch
        %586 = sbr.rel (%p583) target = $region80
      $region79: #{tpu_custom_call.1} parent=5 // pred_region
        %s587 = ssub.s32 %s32, 1
        %s588 = sand.u32 %s115, 1
        %s589 = scalar_lea.sflag [#allocation3], %s588
        %s590 = sand.u32 %s115, 1
        %s591 = smul.addr %s590, 8
        %s592 = scalar_lea.vmem [#allocation2], %s591
        // Predicated region
        $region81: #{tpu_custom_call.1} parent=79 // pred_check
          %p593 = pneg %p128
        $region82: #{tpu_custom_call.1} parent=79 // pred_check_branch
          %595 = sbr.rel (%p593) target = $region84
        $region83: #{tpu_custom_call.1} parent=79 // pred_region
          %596 = dma.done %s589, 128
        $region84: #{tpu_custom_call.1} parent=79 // pred_fallthru
          _
        %s597 = sand.u32 %s37, 1
        %s598 = scalar_lea.sflag [#allocation6], %s597
        %s599 = sand.u32 %s143, 1
        %s600 = smul.addr %s599, 8
        %s601 = scalar_lea.vmem [#allocation5], %s600
        // Predicated region
        $region85: #{tpu_custom_call.1} parent=79 // pred_check
          %p602 = pneg %p156
        $region86: #{tpu_custom_call.1} parent=79 // pred_check_branch
          %604 = sbr.rel (%p602) target = $region88
        $region87: #{tpu_custom_call.1} parent=79 // pred_region
          %605 = dma.done %s598, 128
        $region88: #{tpu_custom_call.1} parent=79 // pred_fallthru
          _
        %s606 = sand.u32 %s37, 1
        %s607 = scalar_lea.sflag [#allocation6], %s606
        %s608 = sand.u32 %s171, 1
        %s609 = smul.addr %s608, 8
        %s610 = scalar_lea.vmem [#allocation7], %s609
        // Predicated region
        $region89: #{tpu_custom_call.1} parent=79 // pred_check
          %p611 = pneg %p184
        $region90: #{tpu_custom_call.1} parent=79 // pred_check_branch
          %613 = sbr.rel (%p611) target = $region92
        $region91: #{tpu_custom_call.1} parent=79 // pred_region
          %614 = dma.done %s607, 128
        $region92: #{tpu_custom_call.1} parent=79 // pred_fallthru
          _
        // Predicated region
        $region93: #{tpu_custom_call.1} parent=79 // pred_check
          %p615 = pneg %p233
        $region94: #{tpu_custom_call.1} parent=79 // pred_check_branch
          %617 = sbr.rel (%p615) target = $region96
        $region95: #{tpu_custom_call.1} parent=79 // pred_region
          %618 = dma.done [#allocation9], 32
        $region96: #{tpu_custom_call.1} parent=79 // pred_fallthru
          _
        // Predicated region
        $region97: #{tpu_custom_call.1} parent=79 // pred_check
          %p619 = pneg %p254
        $region98: #{tpu_custom_call.1} parent=79 // pred_check_branch
          %621 = sbr.rel (%p619) target = $region100
        $region99: #{tpu_custom_call.1} parent=79 // pred_region
          %622 = dma.done [#allocation9], 32
        $region100: #{tpu_custom_call.1} parent=79 // pred_fallthru
          _
        // Predicated region
        $region101: #{tpu_custom_call.1} parent=79 // pred_check
          %p623 = pneg %p275
        $region102: #{tpu_custom_call.1} parent=79 // pred_check_branch
          %625 = sbr.rel (%p623) target = $region104
        $region103: #{tpu_custom_call.1} parent=79 // pred_region
          %626 = dma.done [#allocation12], 32
        $region104: #{tpu_custom_call.1} parent=79 // pred_fallthru
          _
        %s627 = sadd.s32 %s41, %s42
        %p628 = scmp.lt.s32.totalorder %s627, 1
        %s629 = scalar_select %p628, %s627, 1
        %s630 = smul.addr %s629, 8
        %s631 = scalar_lea.vmem %s0, %s630
        %p632 = pneg %p72
        %p633 = pneg %p69
        %s634 = sadd.s32 %s41, %s42
        %p635 = scmp.lt.s32.totalorder %s634, 1
        %s636 = scalar_select %p635, %s634, 1
        %s637 = smul.addr %s636, 8
        %s638 = scalar_lea.vmem %s1, %s637
        %p639 = pneg %p100
        %p640 = pneg %p97
        %s641 = sand.u32 %s115, 1
        %s642 = scalar_lea.sflag [#allocation3], %s641
        %s643 = sand.u32 %s115, 1
        %s644 = smul.addr %s643, 8
        %s645 = scalar_lea.vmem [#allocation2], %s644
        %p646 = pneg %p128
        %p647 = pneg %p125
        %s648 = sand.u32 %s37, 1
        %s649 = scalar_lea.sflag [#allocation6], %s648
        %s650 = sand.u32 %s143, 1
        %s651 = smul.addr %s650, 8
        %s652 = scalar_lea.vmem [#allocation5], %s651
        %p653 = pneg %p156
        %p654 = pneg %p153
        %s655 = sand.u32 %s37, 1
        %s656 = scalar_lea.sflag [#allocation6], %s655
        %s657 = sand.u32 %s171, 1
        %s658 = smul.addr %s657, 8
        %s659 = scalar_lea.vmem [#allocation7], %s658
        %p660 = pneg %p184
        %p661 = pneg %p181
        %s662 = sadd.s32 %s41, %s42
        %p663 = scmp.lt.s32.totalorder %s662, 1
        %s664 = scalar_select %p663, %s662, 1
        %s665 = smul.addr %s664, 8
        %s666 = scalar_lea.vmem %s5, %s665
        %p667 = pneg %p212
        %p668 = pneg %p209
        %p669 = pneg %p233
        %p670 = pneg %p230
        %p671 = pneg %p254
        %p672 = pneg %p251
        %p673 = pneg %p275
        %p674 = pneg %p272
        %p675 = pneg %p296
        %p676 = pneg %p293
        %p677 = pneg %p317
        %p678 = pneg %p314
        %p679 = pneg %p338
        %p680 = pneg %p335
        %p681 = pneg %p359
        %p682 = pneg %p356
        %p683 = pneg %p380
        %p684 = pneg %p377
        %p685 = pneg %p401
        %p686 = pneg %p398
        %p687 = pneg %p427
        %p688 = pneg %p424
        %s689 = sand.u32 %s414, 1
        %s690 = scalar_lea.sflag [#allocation4], %s689
        %s691 = sand.u32 %s414, 1
        %s692 = smul.addr %s691, 16
        %s693 = scalar_lea.vmem [#allocation13], %s692
        %s694 = sadd.s32 %s41, %s42
        %p695 = scmp.lt.s32.totalorder %s694, 1
        %s696 = scalar_select %p695, %s694, 1
        %s697 = smul.addr %s696, 8
        %s698 = scalar_lea.vmem %s0, %s697
        %s699 = sadd.s32 %s41, %s42
        %s700 = sadd.s32 %s41, %s42
        %p701 = scmp.lt.s32.totalorder %s700, 1
        %s702 = scalar_select %p701, %s700, 1
        %s703 = smul.addr %s702, 8
        %s704 = scalar_lea.vmem %s1, %s703
        %s705 = sadd.s32 %s41, %s42
        %s706 = sadd.s32 %s41, %s42
        %s707 = sadd.s32 %s41, %s42
        %s708 = sadd.s32 %s41, %s42
        %s709 = sadd.s32 %s41, %s42
        %p710 = scmp.lt.s32.totalorder %s709, 1
        %s711 = scalar_select %p710, %s709, 1
        %s712 = smul.addr %s711, 8
        %s713 = scalar_lea.vmem %s5, %s712
        %s714 = sadd.s32 %s41, %s42
        %p715 = scmp.eq.s32.totalorder %s42, 0
        // Predicated region
        $region105: #{tpu_custom_call.1} parent=79 // pred_check
          %p716 = pneg %p715
        $region106: #{tpu_custom_call.1} parent=79 // pred_check_branch
          %718 = sbr.rel (%p716) target = $region108
        $region107: #{tpu_custom_call.1} parent=79 // pred_region
          %719 = vst [vmem:[%s693] sm:$0xff] 0.0
          %720 = vst [vmem:[%s693 + $0x8] sm:$0xff] 0.0
        $region108: #{tpu_custom_call.1} parent=79 // pred_fallthru
          _
        %v721 = vld [vmem:[%s693] sm:$0xff]
        %v722 = vld [vmem:[%s693 + $0x8] sm:$0xff]
        %v723 = vlaneseq
        %v724 = vshrl.u32 %v723, 7
        %v725 = vadd.s32 %v724, 8
        %v726 = vld [vmem:[%s698] sm:$0xff]
        %v727 = vld [vmem:[%s704] sm:$0xff]
        %v728 = vand.u32 2147483647, %v726
        %v729 = vsub.f32 0.0, %v728
        %v730 = vmul.f32 %v729, 1.442695
        %v731 = vpow.pop %v730
        %v732 = vadd.f32 %v731, 1.0
        %v733 = vlog2.pop %v732
        %v734 = vmul.f32 %v733, 0.6931472
        %v735 = vmin.f32 %v726, 0.0
        %v736 = vsub.f32 %v735, %v734
        %v737 = vmax.f32 %v736, -9.2103405
        %v738 = vmin.f32 %v737, -0.000100005
        %v739 = vmax.f32 %v726, 0.0
        %v740 = vsub.f32 0.0, %v739
        %v741 = vsub.f32 %v740, %v734
        %v742 = vmax.f32 %v741, -9.2103405
        %v743 = vmin.f32 %v742, -0.000100005
        %vm744 = vcmp.ge.f32.partialorder %v726, 0.0
        %v745 = vsel %vm744, 1.0, %v731
        %v746 = vrcp.pop %v732
        %v747 = vmul.f32 %v745, %v746
        %v748 = vmax.f32 %v747, 0.0001
        %v749 = vmin.f32 %v748, 0.9999
        %vm750 = vcmp.eq.f32.partialorder %v727, 1.0
        %v751 = vsel %vm750, 1, 0
        %v752 = vcvt.s32.f32 %v751
        %v753 = vsub.f32 1.0, %v749
        %v754 = vsub.f32 1.0, %v727
        %v755 = vmul.f32 %v754, %v754
        %v756 = vmul.f32 %v755, %v755
        %v757 = vmul.f32 %v738, %v753
        %v758 = vmul.f32 %v757, %v753
        %v759 = vmul.f32 %v758, %v752
        %v760 = vmul.f32 %v743, %v749
        %v761 = vmul.f32 %v760, %v749
        %v762 = vmul.f32 %v761, %v756
        %v763 = vadd.f32 %v759, %v762
        %764 = vadd.xlane.f32.xlu0 %v763
        %v765 = vpop.xlane.xlu0 %764
        %v766 = vrot.slane %v765, 4
        %v767 = vadd.f32 %v765, %v766
        %v768 = vrot.slane %v767, 2
        %v769 = vadd.f32 %v767, %v768
        %v770 = vrot.slane %v769, 1
        %v771 = vadd.f32 %v769, %v770
        %s772 = vtos %v771
        %773 = vadd.xlane.f32.xlu0 %v752
        %v774 = vpop.xlane.xlu0 %773
        %v775 = vrot.slane %v774, 4
        %v776 = vadd.f32 %v774, %v775
        %v777 = vrot.slane %v776, 2
        %v778 = vadd.f32 %v776, %v777
        %v779 = vrot.slane %v778, 1
        %v780 = vadd.f32 %v778, %v779
        %s781 = vtos %v780
        %vm782 = vcmp.eq.s32.totalorder %v724, 0
        %vm783 = vcmp.eq.s32.totalorder %v725, 0
        %v784 = vstv %s772
        %v785 = vsel %vm782, %v784, 0.0
        %v786 = vsel %vm783, %v784, 0.0
        %v787 = vadd.f32 %v785, 0.0
        %v788 = vadd.f32 %v786, 0.0
        %vm789 = vcmp.eq.s32.totalorder %v724, 1
        %vm790 = vcmp.eq.s32.totalorder %v725, 1
        %v791 = vstv %s781
        %v792 = vsel %vm789, %v791, 0.0
        %v793 = vsel %vm790, %v791, 0.0
        %v794 = vadd.f32 %v787, %v792
        %v795 = vadd.f32 %v788, %v793
        %v796 = vld [vmem:[%s592] sm:$0xff]
        %v797 = vld [vmem:[%s601] sm:$0xff]
        %v798 = vand.u32 2147483647, %v796
        %v799 = vsub.f32 0.0, %v798
        %v800 = vmul.f32 %v799, 1.442695
        %v801 = vpow.pop %v800
        %v802 = vadd.f32 %v801, 1.0
        %v803 = vlog2.pop %v802
        %v804 = vmul.f32 %v803, 0.6931472
        %v805 = vmin.f32 %v796, 0.0
        %v806 = vsub.f32 %v805, %v804
        %v807 = vmax.f32 %v806, -9.2103405
        %v808 = vmin.f32 %v807, -0.000100005
        %v809 = vmax.f32 %v796, 0.0
        %v810 = vsub.f32 0.0, %v809
        %v811 = vsub.f32 %v810, %v804
        %v812 = vmax.f32 %v811, -9.2103405
        %v813 = vmin.f32 %v812, -0.000100005
        %vm814 = vcmp.ge.f32.partialorder %v796, 0.0
        %v815 = vsel %vm814, 1.0, %v801
        %v816 = vrcp.pop %v802
        %v817 = vmul.f32 %v815, %v816
        %v818 = vmax.f32 %v817, 0.0001
        %v819 = vmin.f32 %v818, 0.9999
        %vm820 = vcmp.eq.f32.partialorder %v797, 1.0
        %v821 = vsel %vm820, 1, 0
        %v822 = vcvt.s32.f32 %v821
        %v823 = vsub.f32 1.0, %v819
        %v824 = vsub.f32 1.0, %v797
        %v825 = vmul.f32 %v824, %v824
        %v826 = vmul.f32 %v825, %v825
        %v827 = vmul.f32 %v808, %v823
        %v828 = vmul.f32 %v827, %v823
        %v829 = vmul.f32 %v828, %v822
        %v830 = vmul.f32 %v813, %v819
        %v831 = vmul.f32 %v830, %v819
        %v832 = vmul.f32 %v831, %v826
        %v833 = vadd.f32 %v829, %v832
        %834 = vadd.xlane.f32.xlu0 %v833
        %v835 = vpop.xlane.xlu0 %834
        %v836 = vrot.slane %v835, 4
        %v837 = vadd.f32 %v835, %v836
        %v838 = vrot.slane %v837, 2
        %v839 = vadd.f32 %v837, %v838
        %v840 = vrot.slane %v839, 1
        %v841 = vadd.f32 %v839, %v840
        %s842 = vtos %v841
        %843 = vadd.xlane.f32.xlu0 %v822
        %v844 = vpop.xlane.xlu0 %843
        %v845 = vrot.slane %v844, 4
        %v846 = vadd.f32 %v844, %v845
        %v847 = vrot.slane %v846, 2
        %v848 = vadd.f32 %v846, %v847
        %v849 = vrot.slane %v848, 1
        %v850 = vadd.f32 %v848, %v849
        %s851 = vtos %v850
        %vm852 = vcmp.eq.s32.totalorder %v724, 2
        %vm853 = vcmp.eq.s32.totalorder %v725, 2
        %v854 = vstv %s842
        %v855 = vsel %vm852, %v854, 0.0
        %v856 = vsel %vm853, %v854, 0.0
        %v857 = vadd.f32 %v794, %v855
        %v858 = vadd.f32 %v795, %v856
        %vm859 = vcmp.eq.s32.totalorder %v724, 3
        %vm860 = vcmp.eq.s32.totalorder %v725, 3
        %v861 = vstv %s851
        %v862 = vsel %vm859, %v861, 0.0
        %v863 = vsel %vm860, %v861, 0.0
        %v864 = vadd.f32 %v857, %v862
        %v865 = vadd.f32 %v858, %v863
        %v866 = vld [vmem:[%s610] sm:$0xff]
        %v867 = vld [vmem:[%s713] sm:$0xff]
        %v868 = vand.u32 2147483647, %v866
        %v869 = vsub.f32 0.0, %v868
        %v870 = vmul.f32 %v869, 1.442695
        %v871 = vpow.pop %v870
        %v872 = vadd.f32 %v871, 1.0
        %v873 = vlog2.pop %v872
        %v874 = vmul.f32 %v873, 0.6931472
        %v875 = vmin.f32 %v866, 0.0
        %v876 = vsub.f32 %v875, %v874
        %v877 = vmax.f32 %v876, -9.2103405
        %v878 = vmin.f32 %v877, -0.000100005
        %v879 = vmax.f32 %v866, 0.0
        %v880 = vsub.f32 0.0, %v879
        %v881 = vsub.f32 %v880, %v874
        %v882 = vmax.f32 %v881, -9.2103405
        %v883 = vmin.f32 %v882, -0.000100005
        %vm884 = vcmp.ge.f32.partialorder %v866, 0.0
        %v885 = vsel %vm884, 1.0, %v871
        %v886 = vrcp.pop %v872
        %v887 = vmul.f32 %v885, %v886
        %v888 = vmax.f32 %v887, 0.0001
        %v889 = vmin.f32 %v888, 0.9999
        %vm890 = vcmp.eq.f32.partialorder %v867, 1.0
        %v891 = vsel %vm890, 1, 0
        %v892 = vcvt.s32.f32 %v891
        %v893 = vsub.f32 1.0, %v889
        %v894 = vsub.f32 1.0, %v867
        %v895 = vmul.f32 %v894, %v894
        %v896 = vmul.f32 %v895, %v895
        %v897 = vmul.f32 %v878, %v893
        %v898 = vmul.f32 %v897, %v893
        %v899 = vmul.f32 %v898, %v892
        %v900 = vmul.f32 %v883, %v889
        %v901 = vmul.f32 %v900, %v889
        %v902 = vmul.f32 %v901, %v896
        %v903 = vadd.f32 %v899, %v902
        %904 = vadd.xlane.f32.xlu0 %v903
        %v905 = vpop.xlane.xlu0 %904
        %v906 = vrot.slane %v905, 4
        %v907 = vadd.f32 %v905, %v906
        %v908 = vrot.slane %v907, 2
        %v909 = vadd.f32 %v907, %v908
        %v910 = vrot.slane %v909, 1
        %v911 = vadd.f32 %v909, %v910
        %s912 = vtos %v911
        %913 = vadd.xlane.f32.xlu0 %v892
        %v914 = vpop.xlane.xlu0 %913
        %v915 = vrot.slane %v914, 4
        %v916 = vadd.f32 %v914, %v915
        %v917 = vrot.slane %v916, 2
        %v918 = vadd.f32 %v916, %v917
        %v919 = vrot.slane %v918, 1
        %v920 = vadd.f32 %v918, %v919
        %s921 = vtos %v920
        %vm922 = vcmp.eq.s32.totalorder %v724, 4
        %vm923 = vcmp.eq.s32.totalorder %v725, 4
        %v924 = vstv %s912
        %v925 = vsel %vm922, %v924, 0.0
        %v926 = vsel %vm923, %v924, 0.0
        %v927 = vadd.f32 %v864, %v925
        %v928 = vadd.f32 %v865, %v926
        %vm929 = vcmp.eq.s32.totalorder %v724, 5
        %vm930 = vcmp.eq.s32.totalorder %v725, 5
        %v931 = vstv %s921
        %v932 = vsel %vm929, %v931, 0.0
        %v933 = vsel %vm930, %v931, 0.0
        %v934 = vadd.f32 %v927, %v932
        %v935 = vadd.f32 %v928, %v933
        %v936 = vadd.f32 %v721, %v934
        %v937 = vadd.f32 %v722, %v935
        %938 = vst [vmem:[%s693] sm:$0xff] %v936
        %939 = vst [vmem:[%s693 + $0x8] sm:$0xff] %v937
        %p940 = scmp.eq.s32.totalorder %s41, 0
        %p941 = pnand %p940, %p715
        %p942 = pneg %p941
        // Predicated region
        $region109: #{tpu_custom_call.1} parent=79 // pred_check
          _
        $region110: #{tpu_custom_call.1} parent=79 // pred_check_branch
          %944 = sbr.rel (%p941) target = $region112
        $region111: #{tpu_custom_call.1} parent=79 // pred_region
          %v945 = vld [vmem:[#allocation8] sm:$0x3]
          %v946 = vld [vmem:[#allocation10] sm:$0x3]
          %v947 = vld [vmem:[#allocation11] sm:$0x3]
          %vm948 = vcmask 58368
          %v949 = vsel %vm948, %v947, 0.0
          %950 = vadd.xlane.f32.xlu0 %v949
          %v951 = vpop.xlane.xlu0 %950
          %v952 = vadd.f32 %v951, 0.0001
          %v953 = vrcp.pop %v952
          %v954 = vmul.f32 1.0, %v953
          %v955 = vadd.f32 %v945, %v946
          %v956 = vmul.f32 %v955, 0.5
          %v957 = vsub.f32 %v945, %v956
          %v958 = vsub.f32 %v946, %v956
          %v959 = vmul.f32 %v957, %v957
          %v960 = vmul.f32 %v958, %v958
          %v961 = vadd.f32 %v959, %v960
          %v962 = vmul.f32 %v961, %v947
          %v963 = vmul.f32 %v962, %v954
          %v964 = vsel %vm948, %v963, 0.0
          %965 = vadd.xlane.f32.xlu0 %v964
          %v966 = vpop.xlane.xlu0 %965
          %v967 = vrot.slane %v966, 4
          %v968 = vadd.f32 %v966, %v967
          %v969 = vrot.slane %v968, 2
          %v970 = vadd.f32 %v968, %v969
          %v971 = vrot.slane %v970, 1
          %v972 = vadd.f32 %v970, %v971
          %s973 = vtos %v972
          %v974 = vld [vmem:[%s9] sm:$0xff]
          %v975 = vld [vmem:[%s10] sm:$0xff]
          %v976 = vld [vmem:[%s11] sm:$0xff]
          %v977 = vadd.f32 %v974, %v975
          %v978 = vmul.f32 %v977, 0.5
          %v979 = vlaneseq
          %v980 = vshrl.u32 %v979, 7
          %v981 = vsub.s32 0, %v980
          %v982 = vrot.slane %v956, %v981
          %984 = vset.pattern.permute.xlu0 0
          %985 = vperm.xlu0 %984, %v978
          %v986 = vpop.permute.xlu0 %985
          %v988 = vsub.f32 %v982, %v986
          %v989 = vand.u32 2147483647, %v988
          %v990 = vsub.f32 1.0, %v989
          %v991 = vmax.f32 %v990, 0.0
          %v992 = vlaneseq
          %v993 = vshrl.u32 %v992, 7
          %v994 = vsub.s32 0, %v993
          %v995 = vrot.slane %v954, %v994
          %v996 = vsub.f32 %v991, %v995
          %v997 = vsub.f32 %v951, 1.0
          %v998 = vmul.f32 %v997, %v951
          %v999 = vadd.f32 %v998, 0.0001
          %v1000 = vlaneseq
          %v1001 = vshrl.u32 %v1000, 7
          %v1002 = vsub.s32 0, %v1001
          %v1003 = vrot.slane %v999, %v1002
          %v1004 = vrcp.pop %v1003
          %v1005 = vmul.f32 %v996, %v1004
          %v1006 = vlaneseq
          %v1007 = vshrl.u32 %v1006, 7
          %v1008 = vsub.s32 0, %v1007
          %v1009 = vrot.slane %v947, %v1008
          %1011 = vset.pattern.permute.xlu0 0
          %1012 = vperm.xlu0 %1011, %v976
          %v1013 = vpop.permute.xlu0 %1012
          %v1015 = vmul.f32 %v1009, %v1013
          %v1016 = vmul.f32 %v1005, %v1015
          %vm1017 = vcmask 64512
          %v1018 = vsel %vm1017, %v1016, 0.0
          %1019 = vadd.xlane.f32.xlu0 %v1018
          %v1020 = vpop.xlane.xlu0 %1019
          %v1021 = vrot.slane %v1020, 4
          %v1022 = vadd.f32 %v1020, %v1021
          %v1023 = vrot.slane %v1022, 2
          %v1024 = vadd.f32 %v1022, %v1023
          %v1025 = vrot.slane %v1024, 1
          %v1026 = vadd.f32 %v1024, %v1025
          %s1027 = vtos %v1026
          %v1028 = vstv %s1027
          %v1029 = vadd.f32 %v1028, 0.0
          %v1030 = vlaneseq
          %v1031 = vshrl.u32 %v1030, 7
          %v1032 = vsub.s32 1, %v1031
          %v1033 = vrot.slane %v956, %v1032
          %1034 = vset.pattern.permute.xlu0 1
          %1035 = vperm.xlu0 %1034, %v978
          %v1036 = vpop.permute.xlu0 %1035
          %v1038 = vsub.f32 %v1033, %v1036
          %v1039 = vand.u32 2147483647, %v1038
          %v1040 = vsub.f32 1.0, %v1039
          %v1041 = vmax.f32 %v1040, 0.0
          %v1042 = vlaneseq
          %v1043 = vshrl.u32 %v1042, 7
          %v1044 = vsub.s32 1, %v1043
          %v1045 = vrot.slane %v954, %v1044
          %v1046 = vsub.f32 %v1041, %v1045
          %v1047 = vlaneseq
          %v1048 = vshrl.u32 %v1047, 7
          %v1049 = vsub.s32 1, %v1048
          %v1050 = vrot.slane %v999, %v1049
          %v1051 = vrcp.pop %v1050
          %v1052 = vmul.f32 %v1046, %v1051
          %v1053 = vlaneseq
          %v1054 = vshrl.u32 %v1053, 7
          %v1055 = vsub.s32 1, %v1054
          %v1056 = vrot.slane %v947, %v1055
          %1057 = vset.pattern.permute.xlu0 1
          %1058 = vperm.xlu0 %1057, %v976
          %v1059 = vpop.permute.xlu0 %1058
          %v1061 = vmul.f32 %v1056, %v1059
          %v1062 = vmul.f32 %v1052, %v1061
          %v1063 = vsel %vm1017, %v1062, 0.0
          %1064 = vadd.xlane.f32.xlu0 %v1063
          %v1065 = vpop.xlane.xlu0 %1064
          %v1066 = vrot.slane %v1065, 4
          %v1067 = vadd.f32 %v1065, %v1066
          %v1068 = vrot.slane %v1067, 2
          %v1069 = vadd.f32 %v1067, %v1068
          %v1070 = vrot.slane %v1069, 1
          %v1071 = vadd.f32 %v1069, %v1070
          %s1072 = vtos %v1071
          %v1073 = vstv %s1072
          %v1074 = vadd.f32 %v1029, %v1073
          %v1075 = vld [vmem:[%s12] sm:$0x3f]
          %v1076 = vld [vmem:[%s13] sm:$0x3f]
          %v1077 = vld [vmem:[%s14] sm:$0x1]
          %v1078 = vsub.f32 %v1075, %v1076
          %v1079 = vand.u32 2147483647, %v1078
          %vm1080 = vcmp.lt.f32.partialorder %v1079, 1.0
          %v1081 = vmul.f32 %v1079, 0.5
          %v1082 = vmul.f32 %v1081, %v1079
          %v1083 = vsub.f32 %v1079, 0.5
          %v1084 = vsel %vm1080, %v1082, %v1083
          %v1086 = vlaneseq
          %v1087 = vshrl.u32 %v1086, 7
          %v1088 = vsub.s32 0, %v1087
          %v1089 = vrot.slane %v1077, %v1088
          %v1091 = vmul.f32 %v1084, %v1089
          %vm1092 = vcmask 128000
          %v1093 = vsel %vm1092, %v1091, 0.0
          %1094 = vadd.xlane.f32.xlu0 %v1093
          %v1095 = vpop.xlane.xlu0 %1094
          %v1096 = vrot.slane %v1095, 4
          %v1097 = vadd.f32 %v1095, %v1096
          %v1098 = vrot.slane %v1097, 2
          %v1099 = vadd.f32 %v1097, %v1098
          %v1100 = vrot.slane %v1099, 1
          %v1101 = vadd.f32 %v1099, %v1100
          %s1102 = vtos %v1101
          %vm1103 = vcmask 122880
          %v1104 = vsel %vm1103, %v1077, 0.0
          %1105 = vadd.xlane.f32.xlu0 %v1104
          %v1106 = vpop.xlane.xlu0 %1105
          %v1107 = vrot.slane %v1106, 4
          %v1108 = vadd.f32 %v1106, %v1107
          %v1109 = vrot.slane %v1108, 2
          %v1110 = vadd.f32 %v1108, %v1109
          %v1111 = vrot.slane %v1110, 1
          %v1112 = vadd.f32 %v1110, %v1111
          %s1113 = vtos %v1112
          %vm1114 = vcmp.eq.s32.totalorder %v724, 8
          %vm1115 = vcmp.eq.s32.totalorder %v725, 8
          %v1116 = vstv %s973
          %v1117 = vsel %vm1114, %v1116, 0.0
          %v1118 = vsel %vm1115, %v1116, 0.0
          %vm1119 = vcmp.eq.s32.totalorder %v724, 9
          %vm1120 = vcmp.eq.s32.totalorder %v725, 9
          %v1121 = vsel %vm1119, %v1074, 0.0
          %v1122 = vsel %vm1120, %v1074, 0.0
          %v1123 = vadd.f32 %v1117, %v1121
          %v1124 = vadd.f32 %v1118, %v1122
          %vm1125 = vcmp.eq.s32.totalorder %v724, 10
          %vm1126 = vcmp.eq.s32.totalorder %v725, 10
          %v1127 = vstv %s1102
          %v1128 = vsel %vm1125, %v1127, 0.0
          %v1129 = vsel %vm1126, %v1127, 0.0
          %v1130 = vadd.f32 %v1123, %v1128
          %v1131 = vadd.f32 %v1124, %v1129
          %vm1132 = vcmp.eq.s32.totalorder %v724, 11
          %vm1133 = vcmp.eq.s32.totalorder %v725, 11
          %v1134 = vstv %s1113
          %v1135 = vsel %vm1132, %v1134, 0.0
          %v1136 = vsel %vm1133, %v1134, 0.0
          %v1137 = vadd.f32 %v1130, %v1135
          %v1138 = vadd.f32 %v1131, %v1136
          %v1139 = vld [vmem:[%s693] sm:$0xff]
          %v1140 = vld [vmem:[%s693 + $0x8] sm:$0xff]
          %v1141 = vadd.f32 %v1139, %v1137
          %v1142 = vadd.f32 %v1140, %v1138
          %1143 = vst [vmem:[%s693] sm:$0xff] %v1141
          %1144 = vst [vmem:[%s693 + $0x8] sm:$0xff] %v1142
        $region112: #{tpu_custom_call.1} parent=79 // pred_fallthru
          _
        %s1145 = sand.u32 %s414, 1
        %s1146 = scalar_lea.sflag [#allocation4], %s1145
        %s1147 = sand.u32 %s414, 1
        %s1148 = smul.addr %s1147, 16
        %s1149 = scalar_lea.vmem [#allocation13], %s1148
        // Predicated region
        $region113: #{tpu_custom_call.1} parent=79 // pred_check
          %p1150 = pneg %p424
        $region114: #{tpu_custom_call.1} parent=79 // pred_check_branch
          %1152 = sbr.rel (%p1150) target = $region116
        $region115: #{tpu_custom_call.1} parent=79 // pred_region
          %s1154 = ssub.s32 256, 256
          %1155 = vsyncadd %s1146, %s1154
          %s1156 = smul.addr %s41, 2
          %s1157 = smul.addr %s1156, 128
          %s1158 = scalar_lea.hbm %s15, %s1157
          %s1159 = sshll.u32 %s1149, 4
          %s1160 = int_to_ptr.vmem [resolvable:$true] %s1159
          %1165 = dma.vmem_to_hbm [thread:$0]  %s1160, 256, %s1158, %s1146, 128, 128, 8
        $region116: #{tpu_custom_call.1} parent=79 // pred_fallthru
          _
      $region80: #{tpu_custom_call.1} parent=5 // pred_fallthru
        _
      %p1166 = scmp.le.s32.totalorder 2, %s32
      // Predicated region
      $region117: #{tpu_custom_call.1} parent=5 // pred_check
        %p1167 = pneg %p1166
      $region118: #{tpu_custom_call.1} parent=5 // pred_check_branch
        %1169 = sbr.rel (%p1167) target = $region120
      $region119: #{tpu_custom_call.1} parent=5 // pred_region
        %s1170 = ssub.s32 %s32, 2
        // Predicated region
        $region121: #{tpu_custom_call.1} parent=119 // pred_check
          %p1171 = pneg %p430
        $region122: #{tpu_custom_call.1} parent=119 // pred_check_branch
          %1173 = sbr.rel (%p1171) target = $region124
        $region123: #{tpu_custom_call.1} parent=119 // pred_region
          %s1174 = sand.u32 %s415, 1
          %s1175 = scalar_lea.sflag [#allocation4], %s1174
          %s1176 = sand.u32 %s415, 1
          %s1177 = smul.addr %s1176, 16
          %s1178 = scalar_lea.vmem [#allocation13], %s1177
          %1179 = dma.done %s1175, 256
        $region124: #{tpu_custom_call.1} parent=119 // pred_fallthru
          _
      $region120: #{tpu_custom_call.1} parent=5 // pred_fallthru
        _
    $region6: #{tpu_custom_call.1} parent=1 // loop_footer
      %s36 = sadd.s32 1, %s32
    $region7: #{tpu_custom_call.1} parent=1 // loop_footer_branch
      %31 = sbr.rel target = $region3
    $region8: #{tpu_custom_call.1} parent=1 // loop_exit
      _
    %1180 = vsyncpa [#allocation3], 1
    %s1181 = scalar_lea.sflag [#allocation3], 1
    %1182 = vsyncpa %s1181, 1
    %1183 = vsyncpa [#allocation6], 1
    %s1184 = scalar_lea.sflag [#allocation6], 1
    %1185 = vsyncpa %s1184, 1
    %1186 = vsyncpa [#allocation9], 1
    %1187 = vsyncpa [#allocation12], 1
    %1188 = vsyncpa [#allocation4], 1
    %s1189 = scalar_lea.sflag [#allocation4], 1
    %1190 = vsyncpa %s1189, 1

</llo_original>
